<compile_context>
chip_gen: v7x
topology: tpu7x:2x2x1
jax: 0.10.0
libtpu: 0.0.40
codegen_flags: <defaults>
</compile_context>

<pallas_src>
import functools

import jax
import jax.numpy as jnp
from jax.experimental import pallas as pl
from jax.experimental.pallas import tpu as pltpu

_LANES = 128
_SUBLANES = 8


def _round_up(n, m):
    return ((n + m - 1) // m) * m


# --------------------------------------------------------------------------
# Kernel: one batch tile, transposed "batch-in-lanes" layout.
# --------------------------------------------------------------------------
def _realnvp_kernel(num_blocks, h_sub,
                    x_ref, mask_ref, w1_ref, b1_ref,
                    w2s_ref, b2s_ref, w2t_ref, b2t_ref,
                    y_ref, ldj_ref):
    """All refs are feature-major (features on sublanes, batch on lanes).

    x_ref   : (D, TB)        f32   activations for this batch tile
    mask_ref: (D, 1)         f32   coupling mask (lane-broadcast)
    w1_ref  : (NB, 2*H, D)   f32   fused [W1s; W1t]^T
    b1_ref  : (NB, 2*H, 1)   f32
    w2s_ref : (NB, D, H)     f32   W2s^T   (un-fused: no zero MACs)
    b2s_ref : (NB, D, 1)     f32
    w2t_ref : (NB, D, H)     f32   W2t^T
    b2t_ref : (NB, D, 1)     f32
    y_ref   : (D, TB)        f32
    ldj_ref : (1, TB)        f32   (lane-dense, single sublane row)
    """
    x = x_ref[...]                                        # (D, TB)
    # Hoist the lane-broadcast of the mask out of the unrolled block loop.
    maskb = jnp.broadcast_to(mask_ref[...], x.shape)      # (D, TB)
    ldj = jnp.zeros((1, x.shape[1]), jnp.float32)

    # Static unroll over coupling blocks; all weights are VMEM-resident.
    for k in range(num_blocks):
        mx = x * maskb                                    # (D, TB)

        # Fused layer 1 of the s- and t-nets: one MXU dot -> [h_s; h_t].
        h = jnp.dot(w1_ref[k], mx,
                    preferred_element_type=jnp.float32) + b1_ref[k]
        h = jnp.maximum(h, 0.0)                           # (2H, TB)

        # Layer 2, separate per net (sublane-aligned slices of h are cheap).
        s_out = jnp.tanh(
            jnp.dot(w2s_ref[k], h[:h_sub],
                    preferred_element_type=jnp.float32) + b2s_ref[k])  # (D, TB)
        t_out = (jnp.dot(w2t_ref[k], h[h_sub:],
                         preferred_element_type=jnp.float32) + b2t_ref[k])

        # Coupling update, exactly as in the PyTorch module (reverse=False):
        #   x = masked_x + exp(s)*x + t ;  ldj += sum(s, dim=-1)
        x = mx + jnp.exp(s_out) * x + t_out
        ldj = ldj + jnp.sum(s_out, axis=0, keepdims=True)

    y_ref[...] = x
    ldj_ref[...] = ldj


# --------------------------------------------------------------------------
# Wrapper
# --------------------------------------------------------------------------
def _prepare_params(params, d_sub, h_sub):
    """Transpose stacked per-block weights to feature-major and zero-pad to
    sublane multiples.  The zero padding is numerically inert (relu(0)=0,
    tanh(0)=0 -> no ldj contribution, exp(0)=1 keeps padded x rows at 0)."""

    def padT(a, rows, cols):
        at = jnp.swapaxes(a, 1, 2).astype(jnp.float32)    # (NB, out, in)
        return jnp.pad(at, ((0, 0), (0, rows - at.shape[1]),
                            (0, cols - at.shape[2])))

    w1 = jnp.concatenate([padT(params["w1s"], h_sub, d_sub),
                          padT(params["w1t"], h_sub, d_sub)], axis=1)
    b1 = jnp.concatenate([padT(params["b1s"], h_sub, 1),
                          padT(params["b1t"], h_sub, 1)], axis=1)
    w2s = padT(params["w2s"], d_sub, h_sub)
    b2s = padT(params["b2s"], d_sub, 1)
    w2t = padT(params["w2t"], d_sub, h_sub)
    b2t = padT(params["b2t"], d_sub, 1)
    return w1, b1, w2s, b2s, w2t, b2t


def realnvp_forward(x, mask, params, *, batch_tile=8192, interpret=False):
    """RealNVP forward (reverse=False).

    x: (B, D), mask: (1, D) or (D,), params: dict of stacked per-block weights
    stored as (in, out) (see init_params).  Returns (y (B, D), ldj (B,)).

    Internally the batch lives on lanes and the (tiny) feature dim on
    sublanes; callers that keep their data feature-major (D, B) can skip the
    wrapper-side transposes entirely.
    """
    b, d = x.shape
    nb, _, h = params["w1s"].shape

    d_sub = _round_up(d, _SUBLANES)
    h_sub = _round_up(h, _SUBLANES)

    # Batch tile = lane count per grid step (multiple of 128).
    tb = _round_up(min(batch_tile, _round_up(b, _LANES)), _LANES)
    # Prefer >= 2 grid steps so both v7x TensorCores get work ("parallel").
    if b > _LANES and _round_up(b, tb) // tb < 2:
        tb = _round_up(pl.cdiv(b, 2), _LANES)
    b_pad = _round_up(b, tb)
    grid = (b_pad // tb,)

    x_t = jnp.pad(x.astype(jnp.float32).T, ((0, d_sub - d), (0, b_pad - b)))
    mask_t = jnp.pad(jnp.asarray(mask, jnp.float32).reshape(d, 1),
                     ((0, d_sub - d), (0, 0)))
    w1, b1, w2s, b2s, w2t, b2t = _prepare_params(params, d_sub, h_sub)

    # VMEM budget: resident weights (once) + double-buffered x/y/ldj tiles +
    # spill allowance ~ TB*2H for the statically unrolled intermediates.
    weight_bytes = 4 * nb * (2 * h_sub * d_sub + 2 * h_sub
                             + 2 * d_sub * h_sub + 2 * d_sub)
    io_bytes = 2 * 2 * d_sub * tb * 4 + 2 * tb * 4 + d_sub * 4
    spill_bytes = 2 * (2 * h_sub + 8 * d_sub) * tb * 4
    vmem_limit = int(min(48 * 2**20,
                         max(32 * 2**20,
                             weight_bytes + io_bytes + spill_bytes)))

    kernel = functools.partial(_realnvp_kernel, nb, h_sub)
    batch_map = lambda i: (0, i)
    const2 = lambda i: (0, 0)
    const3 = lambda i: (0, 0, 0)

    y_t, ldj_t = pl.pallas_call(
        kernel,
        grid=grid,
        in_specs=[
            pl.BlockSpec((d_sub, tb), batch_map),            # x tile
            pl.BlockSpec((d_sub, 1), const2),                # mask (resident)
            pl.BlockSpec((nb, 2 * h_sub, d_sub), const3),    # fused W1^T
            pl.BlockSpec((nb, 2 * h_sub, 1), const3),        # fused b1^T
            pl.BlockSpec((nb, d_sub, h_sub), const3),        # W2s^T
            pl.BlockSpec((nb, d_sub, 1), const3),            # b2s^T
            pl.BlockSpec((nb, d_sub, h_sub), const3),        # W2t^T
            pl.BlockSpec((nb, d_sub, 1), const3),            # b2t^T
        ],
        out_specs=(
            pl.BlockSpec((d_sub, tb), batch_map),            # y tile
            pl.BlockSpec((1, tb), batch_map),                # ldj (1 row)
        ),
        out_shape=(
            jax.ShapeDtypeStruct((d_sub, b_pad), jnp.float32),
            jax.ShapeDtypeStruct((1, b_pad), jnp.float32),
        ),
        compiler_params=pltpu.CompilerParams(
            dimension_semantics=("parallel",),
            vmem_limit_bytes=vmem_limit,
        ),
        interpret=interpret,
    )(x_t, mask_t, w1, b1, w2s, b2s, w2t, b2t)

    return y_t[:d, :b].T, ldj_t[0, :b]


# --------------------------------------------------------------------------
# Params + pure-JAX reference (mirrors the PyTorch forward, reverse=False)
# --------------------------------------------------------------------------
def init_params(key, data_dim, hidden_dim, num_blocks):
    """Deterministic parameter init.  Weights stored as (in, out)."""
    ks = jax.random.split(key, 8)
    s1 = 1.0 / jnp.sqrt(data_dim)
    s2 = 1.0 / jnp.sqrt(hidden_dim)
    u = jax.random.uniform
    return {
        # s-network: Linear(D->H), ReLU, Linear(H->D), Tanh
        "w1s": u(ks[0], (num_blocks, data_dim, hidden_dim), jnp.float32, -s1, s1),
        "b1s": u(ks[1], (num_blocks, 1, hidden_dim), jnp.float32, -s1, s1),
        "w2s": u(ks[2], (num_blocks, hidden_dim, data_dim), jnp.float32, -s2, s2),
        "b2s": u(ks[3], (num_blocks, 1, data_dim), jnp.float32, -s2, s2),
        # t-network: Linear(D->H), ReLU, Linear(H->D)
        "w1t": u(ks[4], (num_blocks, data_dim, hidden_dim), jnp.float32, -s1, s1),
        "b1t": u(ks[5], (num_blocks, 1, hidden_dim), jnp.float32, -s1, s1),
        "w2t": u(ks[6], (num_blocks, hidden_dim, data_dim), jnp.float32, -s2, s2),
        "b2t": u(ks[7], (num_blocks, 1, data_dim), jnp.float32, -s2, s2),
    }


def realnvp_reference(x, mask, params):
    """Pure-JAX reference of the PyTorch forward (reverse=False)."""
    hi = jax.lax.Precision.HIGHEST
    num_blocks = params["w1s"].shape[0]
    ldj = jnp.zeros((x.shape[0],), jnp.float32)
    for k in range(num_blocks):
        mx = x * mask
        h_s = jnp.maximum(
            jnp.dot(mx, params["w1s"][k], precision=hi) + params["b1s"][k], 0.0)
        s_out = jnp.tanh(
            jnp.dot(h_s, params["w2s"][k], precision=hi) + params["b2s"][k])
        h_t = jnp.maximum(
            jnp.dot(mx, params["w1t"][k], precision=hi) + params["b1t"][k], 0.0)
        t_out = jnp.dot(h_t, params["w2t"][k], precision=hi) + params["b2t"][k]
        x = mx + jnp.exp(s_out) * x + t_out
        ldj = ldj + jnp.sum(s_out, axis=-1)
    return x, ldj


# --------------------------------------------------------------------------
# Self-test
# --------------------------------------------------------------------------
if __name__ == "__main__":
    data_dim = 8
    hidden_dim = 32
    num_blocks = 4

    key = jax.random.PRNGKey(0)
    kx1, kx2, kp = jax.random.split(key, 3)

    mask = (jnp.arange(data_dim) % 2).astype(jnp.float32).reshape(1, data_dim)
    params = init_params(kp, data_dim, hidden_dim, num_blocks)

    # --- case 1: batch split into 2 tiles by the >=2-grid-steps heuristic ---
    batch = 256
    x = jax.random.normal(kx1, (batch, data_dim), jnp.float32)
    y, ldj = realnvp_forward(x, mask, params)
    jax.block_until_ready((y, ldj))
    y_ref, ldj_ref = realnvp_reference(x, mask, params)
    assert y.shape == (batch, data_dim) and ldj.shape == (batch,)
    assert jnp.allclose(y, y_ref, atol=1e-3, rtol=1e-3)
    assert jnp.allclose(ldj, ldj_ref, atol=1e-3, rtol=1e-3)

    # --- case 2: ragged batch + small explicit tile (padding, 3 grid steps) --
    batch2 = 300
    x2 = jax.random.normal(kx2, (batch2, data_dim), jnp.float32)
    y2, ldj2 = realnvp_forward(x2, mask, params, batch_tile=128)
    jax.block_until_ready((y2, ldj2))
    y2_ref, ldj2_ref = realnvp_reference(x2, mask, params)
    assert y2.shape == (batch2, data_dim) and ldj2.shape == (batch2,)
    assert jnp.allclose(y2, y2_ref, atol=1e-3, rtol=1e-3)
    assert jnp.allclose(ldj2, ldj2_ref, atol=1e-3, rtol=1e-3)

    print("KERNEL_OK")
</pallas_src>

<mosaic_0001>
module attributes {stable_mosaic.version = 11 : i64} {
  func.func @_realnvp_kernel(%arg0: i32, %arg1: memref<8x128xf32, #tpu.memory_space<vmem>>, %arg2: memref<8x1xf32, #tpu.memory_space<vmem>>, %arg3: memref<4x64x8xf32, #tpu.memory_space<vmem>>, %arg4: memref<4x64x1xf32, #tpu.memory_space<vmem>>, %arg5: memref<4x8x32xf32, #tpu.memory_space<vmem>>, %arg6: memref<4x8x1xf32, #tpu.memory_space<vmem>>, %arg7: memref<4x8x32xf32, #tpu.memory_space<vmem>>, %arg8: memref<4x8x1xf32, #tpu.memory_space<vmem>>, %arg9: memref<8x128xf32, #tpu.memory_space<vmem>>, %arg10: memref<1x128xf32, #tpu.memory_space<vmem>>) attributes {dimension_semantics = [#tpu.dimension_semantics<parallel>], iteration_bounds = array<i64: 2>, scalar_prefetch = 0 : i64, scratch_operands = 0 : i64, tpu.core_type = #tpu.core_type<tc>, window_params = [{transform_indices = @transform_0, window_bounds = array<i64: 8, 128>}, {pipeline_mode = #tpu.pipeline_mode<synchronous>, transform_indices = @transform_1, window_bounds = array<i64: 8, 1>}, {pipeline_mode = #tpu.pipeline_mode<synchronous>, transform_indices = @transform_2, window_bounds = array<i64: 4, 64, 8>}, {pipeline_mode = #tpu.pipeline_mode<synchronous>, transform_indices = @transform_3, window_bounds = array<i64: 4, 64, 1>}, {pipeline_mode = #tpu.pipeline_mode<synchronous>, transform_indices = @transform_4, window_bounds = array<i64: 4, 8, 32>}, {pipeline_mode = #tpu.pipeline_mode<synchronous>, transform_indices = @transform_5, window_bounds = array<i64: 4, 8, 1>}, {pipeline_mode = #tpu.pipeline_mode<synchronous>, transform_indices = @transform_6, window_bounds = array<i64: 4, 8, 32>}, {pipeline_mode = #tpu.pipeline_mode<synchronous>, transform_indices = @transform_7, window_bounds = array<i64: 4, 8, 1>}, {transform_indices = @transform_8, window_bounds = array<i64: 8, 128>}, {transform_indices = @transform_9, window_bounds = array<i64: 1, 128>}]} {
    %c0 = arith.constant 0 : index
    %c0_0 = arith.constant 0 : index
    %0 = vector.load %arg1[%c0, %c0_0] : memref<8x128xf32, #tpu.memory_space<vmem>>, vector<8x128xf32>
    %c0_1 = arith.constant 0 : index
    %c0_2 = arith.constant 0 : index
    %1 = vector.load %arg2[%c0_1, %c0_2] : memref<8x1xf32, #tpu.memory_space<vmem>>, vector<8x1xf32>
    %2 = vector.shape_cast %1 : vector<8x1xf32> to vector<8x1xf32>
    %3 = vector.broadcast %2 : vector<8x1xf32> to vector<8x128xf32>
    %cst = arith.constant 0.000000e+00 : f32
    %4 = vector.broadcast %cst : f32 to vector<1x128xf32>
    %5 = arith.mulf %0, %3 : vector<8x128xf32>
    %c0_3 = arith.constant 0 : index
    %c0_4 = arith.constant 0 : index
    %c0_5 = arith.constant 0 : index
    %6 = vector.load %arg3[%c0_3, %c0_4, %c0_5] : memref<4x64x8xf32, #tpu.memory_space<vmem>>, vector<1x64x8xf32>
    %7 = vector.shape_cast %6 : vector<1x64x8xf32> to vector<64x8xf32>
    %cst_6 = arith.constant dense<0.000000e+00> : vector<64x128xf32>
    %8 = tpu.matmul %7, %5, %cst_6 {dimension_numbers = #tpu.dot_dimension_numbers<[1], [0], [0], [1], [0, 0, 1, 1], [], []>} : vector<64x8xf32>, vector<8x128xf32>, vector<64x128xf32> -> vector<64x128xf32>
    %c0_7 = arith.constant 0 : index
    %c0_8 = arith.constant 0 : index
    %c0_9 = arith.constant 0 : index
    %9 = vector.load %arg4[%c0_7, %c0_8, %c0_9] : memref<4x64x1xf32, #tpu.memory_space<vmem>>, vector<1x64x1xf32>
    %10 = vector.shape_cast %9 : vector<1x64x1xf32> to vector<64x1xf32>
    %11 = vector.broadcast %10 : vector<64x1xf32> to vector<64x128xf32>
    %12 = arith.addf %8, %11 : vector<64x128xf32>
    %cst_10 = arith.constant 0.000000e+00 : f32
    %13 = vector.broadcast %cst_10 : f32 to vector<64x128xf32>
    %14 = arith.maximumf %12, %13 : vector<64x128xf32>
    %c0_11 = arith.constant 0 : index
    %c0_12 = arith.constant 0 : index
    %c0_13 = arith.constant 0 : index
    %15 = vector.load %arg5[%c0_11, %c0_12, %c0_13] : memref<4x8x32xf32, #tpu.memory_space<vmem>>, vector<1x8x32xf32>
    %16 = vector.shape_cast %15 : vector<1x8x32xf32> to vector<8x32xf32>
    %17 = vector.extract_strided_slice %14 {offsets = [0, 0], sizes = [32, 128], strides = [1, 1]} : vector<64x128xf32> to vector<32x128xf32>
    %cst_14 = arith.constant dense<0.000000e+00> : vector<8x128xf32>
    %18 = tpu.matmul %16, %17, %cst_14 {dimension_numbers = #tpu.dot_dimension_numbers<[1], [0], [0], [1], [0, 0, 1, 1], [], []>} : vector<8x32xf32>, vector<32x128xf32>, vector<8x128xf32> -> vector<8x128xf32>
    %c0_15 = arith.constant 0 : index
    %c0_16 = arith.constant 0 : index
    %c0_17 = arith.constant 0 : index
    %19 = vector.load %arg6[%c0_15, %c0_16, %c0_17] : memref<4x8x1xf32, #tpu.memory_space<vmem>>, vector<1x8x1xf32>
    %20 = vector.shape_cast %19 : vector<1x8x1xf32> to vector<8x1xf32>
    %21 = vector.broadcast %20 : vector<8x1xf32> to vector<8x128xf32>
    %22 = arith.addf %18, %21 : vector<8x128xf32>
    %23 = math.tanh %22 : vector<8x128xf32>
    %c0_18 = arith.constant 0 : index
    %c0_19 = arith.constant 0 : index
    %c0_20 = arith.constant 0 : index
    %24 = vector.load %arg7[%c0_18, %c0_19, %c0_20] : memref<4x8x32xf32, #tpu.memory_space<vmem>>, vector<1x8x32xf32>
    %25 = vector.shape_cast %24 : vector<1x8x32xf32> to vector<8x32xf32>
    %26 = vector.extract_strided_slice %14 {offsets = [32, 0], sizes = [32, 128], strides = [1, 1]} : vector<64x128xf32> to vector<32x128xf32>
    %cst_21 = arith.constant dense<0.000000e+00> : vector<8x128xf32>
    %27 = tpu.matmul %25, %26, %cst_21 {dimension_numbers = #tpu.dot_dimension_numbers<[1], [0], [0], [1], [0, 0, 1, 1], [], []>} : vector<8x32xf32>, vector<32x128xf32>, vector<8x128xf32> -> vector<8x128xf32>
    %c0_22 = arith.constant 0 : index
    %c0_23 = arith.constant 0 : index
    %c0_24 = arith.constant 0 : index
    %28 = vector.load %arg8[%c0_22, %c0_23, %c0_24] : memref<4x8x1xf32, #tpu.memory_space<vmem>>, vector<1x8x1xf32>
    %29 = vector.shape_cast %28 : vector<1x8x1xf32> to vector<8x1xf32>
    %30 = vector.broadcast %29 : vector<8x1xf32> to vector<8x128xf32>
    %31 = arith.addf %27, %30 : vector<8x128xf32>
    %32 = math.exp %23 : vector<8x128xf32>
    %33 = arith.mulf %32, %0 : vector<8x128xf32>
    %34 = arith.addf %5, %33 : vector<8x128xf32>
    %35 = arith.addf %34, %31 : vector<8x128xf32>
    %cst_25 = arith.constant dense<0.000000e+00> : vector<128xf32>
    %36 = vector.multi_reduction <add>, %23, %cst_25 [0] : vector<8x128xf32> to vector<128xf32>
    %37 = vector.shape_cast %36 : vector<128xf32> to vector<1x128xf32>
    %38 = arith.addf %4, %37 : vector<1x128xf32>
    %39 = arith.mulf %35, %3 : vector<8x128xf32>
    %c1 = arith.constant 1 : index
    %c0_26 = arith.constant 0 : index
    %c0_27 = arith.constant 0 : index
    %40 = vector.load %arg3[%c1, %c0_26, %c0_27] : memref<4x64x8xf32, #tpu.memory_space<vmem>>, vector<1x64x8xf32>
    %41 = vector.shape_cast %40 : vector<1x64x8xf32> to vector<64x8xf32>
    %cst_28 = arith.constant dense<0.000000e+00> : vector<64x128xf32>
    %42 = tpu.matmul %41, %39, %cst_28 {dimension_numbers = #tpu.dot_dimension_numbers<[1], [0], [0], [1], [0, 0, 1, 1], [], []>} : vector<64x8xf32>, vector<8x128xf32>, vector<64x128xf32> -> vector<64x128xf32>
    %c1_29 = arith.constant 1 : index
    %c0_30 = arith.constant 0 : index
    %c0_31 = arith.constant 0 : index
    %43 = vector.load %arg4[%c1_29, %c0_30, %c0_31] : memref<4x64x1xf32, #tpu.memory_space<vmem>>, vector<1x64x1xf32>
    %44 = vector.shape_cast %43 : vector<1x64x1xf32> to vector<64x1xf32>
    %45 = vector.broadcast %44 : vector<64x1xf32> to vector<64x128xf32>
    %46 = arith.addf %42, %45 : vector<64x128xf32>
    %cst_32 = arith.constant 0.000000e+00 : f32
    %47 = vector.broadcast %cst_32 : f32 to vector<64x128xf32>
    %48 = arith.maximumf %46, %47 : vector<64x128xf32>
    %c1_33 = arith.constant 1 : index
    %c0_34 = arith.constant 0 : index
    %c0_35 = arith.constant 0 : index
    %49 = vector.load %arg5[%c1_33, %c0_34, %c0_35] : memref<4x8x32xf32, #tpu.memory_space<vmem>>, vector<1x8x32xf32>
    %50 = vector.shape_cast %49 : vector<1x8x32xf32> to vector<8x32xf32>
    %51 = vector.extract_strided_slice %48 {offsets = [0, 0], sizes = [32, 128], strides = [1, 1]} : vector<64x128xf32> to vector<32x128xf32>
    %cst_36 = arith.constant dense<0.000000e+00> : vector<8x128xf32>
    %52 = tpu.matmul %50, %51, %cst_36 {dimension_numbers = #tpu.dot_dimension_numbers<[1], [0], [0], [1], [0, 0, 1, 1], [], []>} : vector<8x32xf32>, vector<32x128xf32>, vector<8x128xf32> -> vector<8x128xf32>
    %c1_37 = arith.constant 1 : index
    %c0_38 = arith.constant 0 : index
    %c0_39 = arith.constant 0 : index
    %53 = vector.load %arg6[%c1_37, %c0_38, %c0_39] : memref<4x8x1xf32, #tpu.memory_space<vmem>>, vector<1x8x1xf32>
    %54 = vector.shape_cast %53 : vector<1x8x1xf32> to vector<8x1xf32>
    %55 = vector.broadcast %54 : vector<8x1xf32> to vector<8x128xf32>
    %56 = arith.addf %52, %55 : vector<8x128xf32>
    %57 = math.tanh %56 : vector<8x128xf32>
    %c1_40 = arith.constant 1 : index
    %c0_41 = arith.constant 0 : index
    %c0_42 = arith.constant 0 : index
    %58 = vector.load %arg7[%c1_40, %c0_41, %c0_42] : memref<4x8x32xf32, #tpu.memory_space<vmem>>, vector<1x8x32xf32>
    %59 = vector.shape_cast %58 : vector<1x8x32xf32> to vector<8x32xf32>
    %60 = vector.extract_strided_slice %48 {offsets = [32, 0], sizes = [32, 128], strides = [1, 1]} : vector<64x128xf32> to vector<32x128xf32>
    %cst_43 = arith.constant dense<0.000000e+00> : vector<8x128xf32>
    %61 = tpu.matmul %59, %60, %cst_43 {dimension_numbers = #tpu.dot_dimension_numbers<[1], [0], [0], [1], [0, 0, 1, 1], [], []>} : vector<8x32xf32>, vector<32x128xf32>, vector<8x128xf32> -> vector<8x128xf32>
    %c1_44 = arith.constant 1 : index
    %c0_45 = arith.constant 0 : index
    %c0_46 = arith.constant 0 : index
    %62 = vector.load %arg8[%c1_44, %c0_45, %c0_46] : memref<4x8x1xf32, #tpu.memory_space<vmem>>, vector<1x8x1xf32>
    %63 = vector.shape_cast %62 : vector<1x8x1xf32> to vector<8x1xf32>
    %64 = vector.broadcast %63 : vector<8x1xf32> to vector<8x128xf32>
    %65 = arith.addf %61, %64 : vector<8x128xf32>
    %66 = math.exp %57 : vector<8x128xf32>
    %67 = arith.mulf %66, %35 : vector<8x128xf32>
    %68 = arith.addf %39, %67 : vector<8x128xf32>
    %69 = arith.addf %68, %65 : vector<8x128xf32>
    %cst_47 = arith.constant dense<0.000000e+00> : vector<128xf32>
    %70 = vector.multi_reduction <add>, %57, %cst_47 [0] : vector<8x128xf32> to vector<128xf32>
    %71 = vector.shape_cast %70 : vector<128xf32> to vector<1x128xf32>
    %72 = arith.addf %38, %71 : vector<1x128xf32>
    %73 = arith.mulf %69, %3 : vector<8x128xf32>
    %c2 = arith.constant 2 : index
    %c0_48 = arith.constant 0 : index
    %c0_49 = arith.constant 0 : index
    %74 = vector.load %arg3[%c2, %c0_48, %c0_49] : memref<4x64x8xf32, #tpu.memory_space<vmem>>, vector<1x64x8xf32>
    %75 = vector.shape_cast %74 : vector<1x64x8xf32> to vector<64x8xf32>
    %cst_50 = arith.constant dense<0.000000e+00> : vector<64x128xf32>
    %76 = tpu.matmul %75, %73, %cst_50 {dimension_numbers = #tpu.dot_dimension_numbers<[1], [0], [0], [1], [0, 0, 1, 1], [], []>} : vector<64x8xf32>, vector<8x128xf32>, vector<64x128xf32> -> vector<64x128xf32>
    %c2_51 = arith.constant 2 : index
    %c0_52 = arith.constant 0 : index
    %c0_53 = arith.constant 0 : index
    %77 = vector.load %arg4[%c2_51, %c0_52, %c0_53] : memref<4x64x1xf32, #tpu.memory_space<vmem>>, vector<1x64x1xf32>
    %78 = vector.shape_cast %77 : vector<1x64x1xf32> to vector<64x1xf32>
    %79 = vector.broadcast %78 : vector<64x1xf32> to vector<64x128xf32>
    %80 = arith.addf %76, %79 : vector<64x128xf32>
    %cst_54 = arith.constant 0.000000e+00 : f32
    %81 = vector.broadcast %cst_54 : f32 to vector<64x128xf32>
    %82 = arith.maximumf %80, %81 : vector<64x128xf32>
    %c2_55 = arith.constant 2 : index
    %c0_56 = arith.constant 0 : index
    %c0_57 = arith.constant 0 : index
    %83 = vector.load %arg5[%c2_55, %c0_56, %c0_57] : memref<4x8x32xf32, #tpu.memory_space<vmem>>, vector<1x8x32xf32>
    %84 = vector.shape_cast %83 : vector<1x8x32xf32> to vector<8x32xf32>
    %85 = vector.extract_strided_slice %82 {offsets = [0, 0], sizes = [32, 128], strides = [1, 1]} : vector<64x128xf32> to vector<32x128xf32>
    %cst_58 = arith.constant dense<0.000000e+00> : vector<8x128xf32>
    %86 = tpu.matmul %84, %85, %cst_58 {dimension_numbers = #tpu.dot_dimension_numbers<[1], [0], [0], [1], [0, 0, 1, 1], [], []>} : vector<8x32xf32>, vector<32x128xf32>, vector<8x128xf32> -> vector<8x128xf32>
    %c2_59 = arith.constant 2 : index
    %c0_60 = arith.constant 0 : index
    %c0_61 = arith.constant 0 : index
    %87 = vector.load %arg6[%c2_59, %c0_60, %c0_61] : memref<4x8x1xf32, #tpu.memory_space<vmem>>, vector<1x8x1xf32>
    %88 = vector.shape_cast %87 : vector<1x8x1xf32> to vector<8x1xf32>
    %89 = vector.broadcast %88 : vector<8x1xf32> to vector<8x128xf32>
    %90 = arith.addf %86, %89 : vector<8x128xf32>
    %91 = math.tanh %90 : vector<8x128xf32>
    %c2_62 = arith.constant 2 : index
    %c0_63 = arith.constant 0 : index
    %c0_64 = arith.constant 0 : index
    %92 = vector.load %arg7[%c2_62, %c0_63, %c0_64] : memref<4x8x32xf32, #tpu.memory_space<vmem>>, vector<1x8x32xf32>
    %93 = vector.shape_cast %92 : vector<1x8x32xf32> to vector<8x32xf32>
    %94 = vector.extract_strided_slice %82 {offsets = [32, 0], sizes = [32, 128], strides = [1, 1]} : vector<64x128xf32> to vector<32x128xf32>
    %cst_65 = arith.constant dense<0.000000e+00> : vector<8x128xf32>
    %95 = tpu.matmul %93, %94, %cst_65 {dimension_numbers = #tpu.dot_dimension_numbers<[1], [0], [0], [1], [0, 0, 1, 1], [], []>} : vector<8x32xf32>, vector<32x128xf32>, vector<8x128xf32> -> vector<8x128xf32>
    %c2_66 = arith.constant 2 : index
    %c0_67 = arith.constant 0 : index
    %c0_68 = arith.constant 0 : index
    %96 = vector.load %arg8[%c2_66, %c0_67, %c0_68] : memref<4x8x1xf32, #tpu.memory_space<vmem>>, vector<1x8x1xf32>
    %97 = vector.shape_cast %96 : vector<1x8x1xf32> to vector<8x1xf32>
    %98 = vector.broadcast %97 : vector<8x1xf32> to vector<8x128xf32>
    %99 = arith.addf %95, %98 : vector<8x128xf32>
    %100 = math.exp %91 : vector<8x128xf32>
    %101 = arith.mulf %100, %69 : vector<8x128xf32>
    %102 = arith.addf %73, %101 : vector<8x128xf32>
    %103 = arith.addf %102, %99 : vector<8x128xf32>
    %cst_69 = arith.constant dense<0.000000e+00> : vector<128xf32>
    %104 = vector.multi_reduction <add>, %91, %cst_69 [0] : vector<8x128xf32> to vector<128xf32>
    %105 = vector.shape_cast %104 : vector<128xf32> to vector<1x128xf32>
    %106 = arith.addf %72, %105 : vector<1x128xf32>
    %107 = arith.mulf %103, %3 : vector<8x128xf32>
    %c3 = arith.constant 3 : index
    %c0_70 = arith.constant 0 : index
    %c0_71 = arith.constant 0 : index
    %108 = vector.load %arg3[%c3, %c0_70, %c0_71] : memref<4x64x8xf32, #tpu.memory_space<vmem>>, vector<1x64x8xf32>
    %109 = vector.shape_cast %108 : vector<1x64x8xf32> to vector<64x8xf32>
    %cst_72 = arith.constant dense<0.000000e+00> : vector<64x128xf32>
    %110 = tpu.matmul %109, %107, %cst_72 {dimension_numbers = #tpu.dot_dimension_numbers<[1], [0], [0], [1], [0, 0, 1, 1], [], []>} : vector<64x8xf32>, vector<8x128xf32>, vector<64x128xf32> -> vector<64x128xf32>
    %c3_73 = arith.constant 3 : index
    %c0_74 = arith.constant 0 : index
    %c0_75 = arith.constant 0 : index
    %111 = vector.load %arg4[%c3_73, %c0_74, %c0_75] : memref<4x64x1xf32, #tpu.memory_space<vmem>>, vector<1x64x1xf32>
    %112 = vector.shape_cast %111 : vector<1x64x1xf32> to vector<64x1xf32>
    %113 = vector.broadcast %112 : vector<64x1xf32> to vector<64x128xf32>
    %114 = arith.addf %110, %113 : vector<64x128xf32>
    %cst_76 = arith.constant 0.000000e+00 : f32
    %115 = vector.broadcast %cst_76 : f32 to vector<64x128xf32>
    %116 = arith.maximumf %114, %115 : vector<64x128xf32>
    %c3_77 = arith.constant 3 : index
    %c0_78 = arith.constant 0 : index
    %c0_79 = arith.constant 0 : index
    %117 = vector.load %arg5[%c3_77, %c0_78, %c0_79] : memref<4x8x32xf32, #tpu.memory_space<vmem>>, vector<1x8x32xf32>
    %118 = vector.shape_cast %117 : vector<1x8x32xf32> to vector<8x32xf32>
    %119 = vector.extract_strided_slice %116 {offsets = [0, 0], sizes = [32, 128], strides = [1, 1]} : vector<64x128xf32> to vector<32x128xf32>
    %cst_80 = arith.constant dense<0.000000e+00> : vector<8x128xf32>
    %120 = tpu.matmul %118, %119, %cst_80 {dimension_numbers = #tpu.dot_dimension_numbers<[1], [0], [0], [1], [0, 0, 1, 1], [], []>} : vector<8x32xf32>, vector<32x128xf32>, vector<8x128xf32> -> vector<8x128xf32>
    %c3_81 = arith.constant 3 : index
    %c0_82 = arith.constant 0 : index
    %c0_83 = arith.constant 0 : index
    %121 = vector.load %arg6[%c3_81, %c0_82, %c0_83] : memref<4x8x1xf32, #tpu.memory_space<vmem>>, vector<1x8x1xf32>
    %122 = vector.shape_cast %121 : vector<1x8x1xf32> to vector<8x1xf32>
    %123 = vector.broadcast %122 : vector<8x1xf32> to vector<8x128xf32>
    %124 = arith.addf %120, %123 : vector<8x128xf32>
    %125 = math.tanh %124 : vector<8x128xf32>
    %c3_84 = arith.constant 3 : index
    %c0_85 = arith.constant 0 : index
    %c0_86 = arith.constant 0 : index
    %126 = vector.load %arg7[%c3_84, %c0_85, %c0_86] : memref<4x8x32xf32, #tpu.memory_space<vmem>>, vector<1x8x32xf32>
    %127 = vector.shape_cast %126 : vector<1x8x32xf32> to vector<8x32xf32>
    %128 = vector.extract_strided_slice %116 {offsets = [32, 0], sizes = [32, 128], strides = [1, 1]} : vector<64x128xf32> to vector<32x128xf32>
    %cst_87 = arith.constant dense<0.000000e+00> : vector<8x128xf32>
    %129 = tpu.matmul %127, %128, %cst_87 {dimension_numbers = #tpu.dot_dimension_numbers<[1], [0], [0], [1], [0, 0, 1, 1], [], []>} : vector<8x32xf32>, vector<32x128xf32>, vector<8x128xf32> -> vector<8x128xf32>
    %c3_88 = arith.constant 3 : index
    %c0_89 = arith.constant 0 : index
    %c0_90 = arith.constant 0 : index
    %130 = vector.load %arg8[%c3_88, %c0_89, %c0_90] : memref<4x8x1xf32, #tpu.memory_space<vmem>>, vector<1x8x1xf32>
    %131 = vector.shape_cast %130 : vector<1x8x1xf32> to vector<8x1xf32>
    %132 = vector.broadcast %131 : vector<8x1xf32> to vector<8x128xf32>
    %133 = arith.addf %129, %132 : vector<8x128xf32>
    %134 = math.exp %125 : vector<8x128xf32>
    %135 = arith.mulf %134, %103 : vector<8x128xf32>
    %136 = arith.addf %107, %135 : vector<8x128xf32>
    %137 = arith.addf %136, %133 : vector<8x128xf32>
    %cst_91 = arith.constant dense<0.000000e+00> : vector<128xf32>
    %138 = vector.multi_reduction <add>, %125, %cst_91 [0] : vector<8x128xf32> to vector<128xf32>
    %139 = vector.shape_cast %138 : vector<128xf32> to vector<1x128xf32>
    %140 = arith.addf %106, %139 : vector<1x128xf32>
    %c0_92 = arith.constant 0 : index
    %c0_93 = arith.constant 0 : index
    %141 = vector.load %arg9[%c0_92, %c0_93] : memref<8x128xf32, #tpu.memory_space<vmem>>, vector<8x128xf32>
    tpu.vector_store %arg9[%c0_92, %c0_93], %137 {strides = array<i32>} : memref<8x128xf32, #tpu.memory_space<vmem>>, vector<8x128xf32>,
    %c0_94 = arith.constant 0 : index
    %c0_95 = arith.constant 0 : index
    %142 = vector.load %arg10[%c0_94, %c0_95] : memref<1x128xf32, #tpu.memory_space<vmem>>, vector<1x128xf32>
    tpu.vector_store %arg10[%c0_94, %c0_95], %140 {strides = array<i32>} : memref<1x128xf32, #tpu.memory_space<vmem>>, vector<1x128xf32>,
    return
  }
  func.func @transform_0(%arg0: i32) -> (i32, i32) {
    %c0_i32 = arith.constant 0 : i32
    %c0_i32_0 = arith.constant 0 : i32
    return %c0_i32, %arg0 : i32, i32
  }
  func.func @transform_1(%arg0: i32) -> (i32, i32) {
    %c0_i32 = arith.constant 0 : i32
    %c0_i32_0 = arith.constant 0 : i32
    %c0_i32_1 = arith.constant 0 : i32
    return %c0_i32, %c0_i32_0 : i32, i32
  }
  func.func @transform_2(%arg0: i32) -> (i32, i32, i32) {
    %c0_i32 = arith.constant 0 : i32
    %c0_i32_0 = arith.constant 0 : i32
    %c0_i32_1 = arith.constant 0 : i32
    %c0_i32_2 = arith.constant 0 : i32
    return %c0_i32, %c0_i32_0, %c0_i32_1 : i32, i32, i32
  }
  func.func @transform_3(%arg0: i32) -> (i32, i32, i32) {
    %c0_i32 = arith.constant 0 : i32
    %c0_i32_0 = arith.constant 0 : i32
    %c0_i32_1 = arith.constant 0 : i32
    %c0_i32_2 = arith.constant 0 : i32
    return %c0_i32, %c0_i32_0, %c0_i32_1 : i32, i32, i32
  }
  func.func @transform_4(%arg0: i32) -> (i32, i32, i32) {
    %c0_i32 = arith.constant 0 : i32
    %c0_i32_0 = arith.constant 0 : i32
    %c0_i32_1 = arith.constant 0 : i32
    %c0_i32_2 = arith.constant 0 : i32
    return %c0_i32, %c0_i32_0, %c0_i32_1 : i32, i32, i32
  }
  func.func @transform_5(%arg0: i32) -> (i32, i32, i32) {
    %c0_i32 = arith.constant 0 : i32
    %c0_i32_0 = arith.constant 0 : i32
    %c0_i32_1 = arith.constant 0 : i32
    %c0_i32_2 = arith.constant 0 : i32
    return %c0_i32, %c0_i32_0, %c0_i32_1 : i32, i32, i32
  }
  func.func @transform_6(%arg0: i32) -> (i32, i32, i32) {
    %c0_i32 = arith.constant 0 : i32
    %c0_i32_0 = arith.constant 0 : i32
    %c0_i32_1 = arith.constant 0 : i32
    %c0_i32_2 = arith.constant 0 : i32
    return %c0_i32, %c0_i32_0, %c0_i32_1 : i32, i32, i32
  }
  func.func @transform_7(%arg0: i32) -> (i32, i32, i32) {
    %c0_i32 = arith.constant 0 : i32
    %c0_i32_0 = arith.constant 0 : i32
    %c0_i32_1 = arith.constant 0 : i32
    %c0_i32_2 = arith.constant 0 : i32
    return %c0_i32, %c0_i32_0, %c0_i32_1 : i32, i32, i32
  }
  func.func @transform_8(%arg0: i32) -> (i32, i32) {
    %c0_i32 = arith.constant 0 : i32
    %c0_i32_0 = arith.constant 0 : i32
    return %c0_i32, %arg0 : i32, i32
  }
  func.func @transform_9(%arg0: i32) -> (i32, i32) {
    %c0_i32 = arith.constant 0 : i32
    %c0_i32_0 = arith.constant 0 : i32
    return %c0_i32, %arg0 : i32, i32
  }
}

</mosaic_0001>

<llo_original>
// kernel: tpu_custom_call.1
$region0: #{tpu_custom_call.1}
  #allocation0 [shape = 'u32[]', space=smem, size = 0x4, offset = 0x4, fixed_abs, tag = 'smem constant byte address 0x4 - core index']
  #allocation1 [shape = 'u32[144,128]{1,0:T(1,128)}', space=vmem, size = 0x12000, scoped, tag = 'internal scratch']
  %s0 = inlined_call_operand.vmem [shape: f32[8,256], index: 0, kind: input, shape index: {}]
  %s1 = inlined_call_operand.vmem [shape: f32[8,1], index: 1, kind: input, shape index: {}]
  %s2 = inlined_call_operand.vmem [shape: f32[4,64,8], index: 2, kind: input, shape index: {}]
  %s3 = inlined_call_operand.vmem [shape: f32[4,64,1], index: 3, kind: input, shape index: {}]
  %s4 = inlined_call_operand.vmem [shape: f32[4,8,32], index: 4, kind: input, shape index: {}]
  %s5 = inlined_call_operand.vmem [shape: f32[4,8,1], index: 5, kind: input, shape index: {}]
  %s6 = inlined_call_operand.vmem [shape: f32[4,8,32], index: 6, kind: input, shape index: {}]
  %s7 = inlined_call_operand.vmem [shape: f32[4,8,1], index: 7, kind: input, shape index: {}]
  %s8 = inlined_call_operand.hbm [shape: f32[8,256], index: 8, kind: output, shape index: {0}]
  %s9 = inlined_call_operand.hbm [shape: f32[1,256], index: 9, kind: output, shape index: {1}]
  %10 = xla_tuple %s8, %s9
  %s11 = sld [smem:[#allocation0]]
  $region73: #{tpu_custom_call.1} parent=0
    _
  %s13 = ssub.s32 1, %s11
  %s14 = scalar_select 0, %s13, %s11
  $region1: #{tpu_custom_call.1} parent=0
    #allocation2 [shape = 'u8[8192]{0}', space=vmem, size = 0x2000, scoped, tag = 'output window, operand 0']
    #allocation3 [shape = 's32[2]{0}', space=sflag, size = 0x8, scoped, tag = 'scoped memory for tpu_custom_call.1']
    #allocation4 [shape = 'u8[1024]{0}', space=vmem, size = 0x400, scoped, tag = 'output window, operand 1']
    #allocation5 [shape = 's32[2]{0}', space=sflag, size = 0x8, scoped, tag = 'scoped memory for tpu_custom_call.1']
    %15 = vsyncpa [#allocation3], 0
    %s16 = scalar_lea.sflag [#allocation3], 1
    %17 = vsyncpa %s16, 0
    %18 = vsyncpa [#allocation5], 0
    %s19 = scalar_lea.sflag [#allocation5], 1
    %20 = vsyncpa %s19, 0
    loop: start=0, step=1, limit=4
    $region2: #{tpu_custom_call.1} parent=1 // loop_pre_header
      _
    $region3: #{tpu_custom_call.1} parent=1 // loop_header
      %s22 = sphi 0, %s26
      %p23 = scmp.ge.s32.totalorder %s22, 4
      %s32 = sphi 0, %s34
      %s35 = sphi 0, %s32
      %s36 = sphi 0, %s35
      %s52 = sphi 0, %s36
      %s56 = sphi 0, %s56
      %s58 = sphi 0, %s56
      %s59 = sphi 0, %s58
      %s73 = sphi 0, %s59
      %s77 = sphi 0, %s77
      %s79 = sphi 0, %s77
      %s80 = sphi 0, %s79
      %s94 = sphi 0, %s80
      %s98 = sphi 0, %s98
      %s100 = sphi 0, %s98
      %s101 = sphi 0, %s100
      %s115 = sphi 0, %s101
      %s119 = sphi 0, %s119
      %s121 = sphi 0, %s119
      %s122 = sphi 0, %s121
      %s136 = sphi 0, %s122
      %s140 = sphi 0, %s140
      %s142 = sphi 0, %s140
      %s143 = sphi 0, %s142
      %s157 = sphi 0, %s143
      %s161 = sphi 0, %s161
      %s163 = sphi 0, %s161
      %s164 = sphi 0, %s163
      %s178 = sphi 0, %s164
      %s182 = sphi 0, %s182
      %s184 = sphi 0, %s182
      %s185 = sphi 0, %s184
      %s199 = sphi 0, %s185
      %s205 = sphi 0, %s207
      %s208 = sphi 0, %s205
      %s209 = sphi 0, %s208
      %s225 = sphi 0, %s209
      %s231 = sphi 0, %s233
      %s234 = sphi 0, %s231
      %s235 = sphi 0, %s234
      %s251 = sphi 0, %s235
    $region4: #{tpu_custom_call.1} parent=1 // loop_header_branch
      %25 = sbr.rel (%p23) target = $region8
    $region5: #{tpu_custom_call.1} parent=1 // loop_body
      %s27 = ssub.s32 %s22, 1
      %s28 = ssub.s32 %s22, 2
      %s29 = sadd.s32 %s22, 1
      %s30 = ssub.s32 %s22, %s29
      %p31 = scmp.eq.s32.totalorder %s30, 0
      %s33 = sadd.s32 %s32, 1
      %s34 = scalar_select %p31, %s32, %s33
      %p37 = pneg %p31
      %p38 = scmp.eq.s32.totalorder %s22, 1
      %p39 = por %p37, %p38
      %p40 = scmp.ne.s32.totalorder %s32, %s35
      %p41 = scmp.eq.s32.totalorder %s22, 0
      %p42 = por %p40, %p41
      %p43 = scmp.ne.s32.totalorder %s32, %s35
      %p44 = scmp.eq.s32.totalorder %s27, 1
      %p45 = por %p43, %p44
      %p46 = scmp.ne.s32.totalorder %s35, %s36
      %p47 = scmp.eq.s32.totalorder %s27, 0
      %p48 = por %p46, %p47
      %p49 = scmp.ne.s32.totalorder %s35, %s36
      %p50 = scmp.eq.s32.totalorder %s28, 1
      %p51 = por %p49, %p50
      %p53 = scmp.ne.s32.totalorder %s36, %s52
      %p54 = scmp.eq.s32.totalorder %s28, 0
      %p55 = por %p53, %p54
      %s57 = sadd.s32 %s56, 1
      %p60 = scmp.eq.s32.totalorder %s22, 1
      %p61 = scmp.ne.s32.totalorder %s56, %s58
      %p62 = scmp.eq.s32.totalorder %s22, 0
      %p63 = por %p61, %p62
      %p64 = scmp.ne.s32.totalorder %s56, %s58
      %p65 = scmp.eq.s32.totalorder %s27, 1
      %p66 = por %p64, %p65
      %p67 = scmp.ne.s32.totalorder %s58, %s59
      %p68 = scmp.eq.s32.totalorder %s27, 0
      %p69 = por %p67, %p68
      %p70 = scmp.ne.s32.totalorder %s58, %s59
      %p71 = scmp.eq.s32.totalorder %s28, 1
      %p72 = por %p70, %p71
      %p74 = scmp.ne.s32.totalorder %s59, %s73
      %p75 = scmp.eq.s32.totalorder %s28, 0
      %p76 = por %p74, %p75
      %s78 = sadd.s32 %s77, 1
      %p81 = scmp.eq.s32.totalorder %s22, 1
      %p82 = scmp.ne.s32.totalorder %s77, %s79
      %p83 = scmp.eq.s32.totalorder %s22, 0
      %p84 = por %p82, %p83
      %p85 = scmp.ne.s32.totalorder %s77, %s79
      %p86 = scmp.eq.s32.totalorder %s27, 1
      %p87 = por %p85, %p86
      %p88 = scmp.ne.s32.totalorder %s79, %s80
      %p89 = scmp.eq.s32.totalorder %s27, 0
      %p90 = por %p88, %p89
      %p91 = scmp.ne.s32.totalorder %s79, %s80
      %p92 = scmp.eq.s32.totalorder %s28, 1
      %p93 = por %p91, %p92
      %p95 = scmp.ne.s32.totalorder %s80, %s94
      %p96 = scmp.eq.s32.totalorder %s28, 0
      %p97 = por %p95, %p96
      %s99 = sadd.s32 %s98, 1
      %p102 = scmp.eq.s32.totalorder %s22, 1
      %p103 = scmp.ne.s32.totalorder %s98, %s100
      %p104 = scmp.eq.s32.totalorder %s22, 0
      %p105 = por %p103, %p104
      %p106 = scmp.ne.s32.totalorder %s98, %s100
      %p107 = scmp.eq.s32.totalorder %s27, 1
      %p108 = por %p106, %p107
      %p109 = scmp.ne.s32.totalorder %s100, %s101
      %p110 = scmp.eq.s32.totalorder %s27, 0
      %p111 = por %p109, %p110
      %p112 = scmp.ne.s32.totalorder %s100, %s101
      %p113 = scmp.eq.s32.totalorder %s28, 1
      %p114 = por %p112, %p113
      %p116 = scmp.ne.s32.totalorder %s101, %s115
      %p117 = scmp.eq.s32.totalorder %s28, 0
      %p118 = por %p116, %p117
      %s120 = sadd.s32 %s119, 1
      %p123 = scmp.eq.s32.totalorder %s22, 1
      %p124 = scmp.ne.s32.totalorder %s119, %s121
      %p125 = scmp.eq.s32.totalorder %s22, 0
      %p126 = por %p124, %p125
      %p127 = scmp.ne.s32.totalorder %s119, %s121
      %p128 = scmp.eq.s32.totalorder %s27, 1
      %p129 = por %p127, %p128
      %p130 = scmp.ne.s32.totalorder %s121, %s122
      %p131 = scmp.eq.s32.totalorder %s27, 0
      %p132 = por %p130, %p131
      %p133 = scmp.ne.s32.totalorder %s121, %s122
      %p134 = scmp.eq.s32.totalorder %s28, 1
      %p135 = por %p133, %p134
      %p137 = scmp.ne.s32.totalorder %s122, %s136
      %p138 = scmp.eq.s32.totalorder %s28, 0
      %p139 = por %p137, %p138
      %s141 = sadd.s32 %s140, 1
      %p144 = scmp.eq.s32.totalorder %s22, 1
      %p145 = scmp.ne.s32.totalorder %s140, %s142
      %p146 = scmp.eq.s32.totalorder %s22, 0
      %p147 = por %p145, %p146
      %p148 = scmp.ne.s32.totalorder %s140, %s142
      %p149 = scmp.eq.s32.totalorder %s27, 1
      %p150 = por %p148, %p149
      %p151 = scmp.ne.s32.totalorder %s142, %s143
      %p152 = scmp.eq.s32.totalorder %s27, 0
      %p153 = por %p151, %p152
      %p154 = scmp.ne.s32.totalorder %s142, %s143
      %p155 = scmp.eq.s32.totalorder %s28, 1
      %p156 = por %p154, %p155
      %p158 = scmp.ne.s32.totalorder %s143, %s157
      %p159 = scmp.eq.s32.totalorder %s28, 0
      %p160 = por %p158, %p159
      %s162 = sadd.s32 %s161, 1
      %p165 = scmp.eq.s32.totalorder %s22, 1
      %p166 = scmp.ne.s32.totalorder %s161, %s163
      %p167 = scmp.eq.s32.totalorder %s22, 0
      %p168 = por %p166, %p167
      %p169 = scmp.ne.s32.totalorder %s161, %s163
      %p170 = scmp.eq.s32.totalorder %s27, 1
      %p171 = por %p169, %p170
      %p172 = scmp.ne.s32.totalorder %s163, %s164
      %p173 = scmp.eq.s32.totalorder %s27, 0
      %p174 = por %p172, %p173
      %p175 = scmp.ne.s32.totalorder %s163, %s164
      %p176 = scmp.eq.s32.totalorder %s28, 1
      %p177 = por %p175, %p176
      %p179 = scmp.ne.s32.totalorder %s164, %s178
      %p180 = scmp.eq.s32.totalorder %s28, 0
      %p181 = por %p179, %p180
      %s183 = sadd.s32 %s182, 1
      %p186 = scmp.eq.s32.totalorder %s22, 1
      %p187 = scmp.ne.s32.totalorder %s182, %s184
      %p188 = scmp.eq.s32.totalorder %s22, 0
      %p189 = por %p187, %p188
      %p190 = scmp.ne.s32.totalorder %s182, %s184
      %p191 = scmp.eq.s32.totalorder %s27, 1
      %p192 = por %p190, %p191
      %p193 = scmp.ne.s32.totalorder %s184, %s185
      %p194 = scmp.eq.s32.totalorder %s27, 0
      %p195 = por %p193, %p194
      %p196 = scmp.ne.s32.totalorder %s184, %s185
      %p197 = scmp.eq.s32.totalorder %s28, 1
      %p198 = por %p196, %p197
      %p200 = scmp.ne.s32.totalorder %s185, %s199
      %p201 = scmp.eq.s32.totalorder %s28, 0
      %p202 = por %p200, %p201
      %s203 = ssub.s32 %s22, %s29
      %p204 = scmp.eq.s32.totalorder %s203, 0
      %s206 = sadd.s32 %s205, 1
      %s207 = scalar_select %p204, %s205, %s206
      %p210 = pneg %p204
      %p211 = scmp.eq.s32.totalorder %s22, 1
      %p212 = por %p210, %p211
      %p213 = scmp.ne.s32.totalorder %s205, %s208
      %p214 = scmp.eq.s32.totalorder %s22, 0
      %p215 = por %p213, %p214
      %p216 = scmp.ne.s32.totalorder %s205, %s208
      %p217 = scmp.eq.s32.totalorder %s27, 1
      %p218 = por %p216, %p217
      %p219 = scmp.ne.s32.totalorder %s208, %s209
      %p220 = scmp.eq.s32.totalorder %s27, 0
      %p221 = por %p219, %p220
      %p222 = scmp.ne.s32.totalorder %s208, %s209
      %p223 = scmp.eq.s32.totalorder %s28, 1
      %p224 = por %p222, %p223
      %p226 = scmp.ne.s32.totalorder %s209, %s225
      %p227 = scmp.eq.s32.totalorder %s28, 0
      %p228 = por %p226, %p227
      %s229 = ssub.s32 %s22, %s29
      %p230 = scmp.eq.s32.totalorder %s229, 0
      %s232 = sadd.s32 %s231, 1
      %s233 = scalar_select %p230, %s231, %s232
      %p236 = pneg %p230
      %p237 = scmp.eq.s32.totalorder %s22, 1
      %p238 = por %p236, %p237
      %p239 = scmp.ne.s32.totalorder %s231, %s234
      %p240 = scmp.eq.s32.totalorder %s22, 0
      %p241 = por %p239, %p240
      %p242 = scmp.ne.s32.totalorder %s231, %s234
      %p243 = scmp.eq.s32.totalorder %s27, 1
      %p244 = por %p242, %p243
      %p245 = scmp.ne.s32.totalorder %s234, %s235
      %p246 = scmp.eq.s32.totalorder %s27, 0
      %p247 = por %p245, %p246
      %p248 = scmp.ne.s32.totalorder %s234, %s235
      %p249 = scmp.eq.s32.totalorder %s28, 1
      %p250 = por %p248, %p249
      %p252 = scmp.ne.s32.totalorder %s235, %s251
      %p253 = scmp.eq.s32.totalorder %s28, 0
      %p254 = por %p252, %p253
      %p255 = scmp.le.s32.totalorder 1, %s22
      %p256 = scmp.lt.s32.totalorder %s22, 3
      %p257 = pnand %p255, %p256
      %p258 = pneg %p257
      // Predicated region
      $region9: #{tpu_custom_call.1} parent=5 // pred_check
        _
      $region10: #{tpu_custom_call.1} parent=5 // pred_check_branch
        %260 = sbr.rel (%p257) target = $region12
      $region11: #{tpu_custom_call.1} parent=5 // pred_region
        %s261 = ssub.s32 %s22, 1
        // Predicated region
        $region13: #{tpu_custom_call.1} parent=11 // pred_check
          %p262 = pneg %p69
        $region14: #{tpu_custom_call.1} parent=11 // pred_check_branch
          %264 = sbr.rel (%p262) target = $region16
        $region15: #{tpu_custom_call.1} parent=11 // pred_region
          _
        $region16: #{tpu_custom_call.1} parent=11 // pred_fallthru
          _
        // Predicated region
        $region17: #{tpu_custom_call.1} parent=11 // pred_check
          %p265 = pneg %p90
        $region18: #{tpu_custom_call.1} parent=11 // pred_check_branch
          %267 = sbr.rel (%p265) target = $region20
        $region19: #{tpu_custom_call.1} parent=11 // pred_region
          _
        $region20: #{tpu_custom_call.1} parent=11 // pred_fallthru
          _
        // Predicated region
        $region21: #{tpu_custom_call.1} parent=11 // pred_check
          %p268 = pneg %p111
        $region22: #{tpu_custom_call.1} parent=11 // pred_check_branch
          %270 = sbr.rel (%p268) target = $region24
        $region23: #{tpu_custom_call.1} parent=11 // pred_region
          _
        $region24: #{tpu_custom_call.1} parent=11 // pred_fallthru
          _
        // Predicated region
        $region25: #{tpu_custom_call.1} parent=11 // pred_check
          %p271 = pneg %p132
        $region26: #{tpu_custom_call.1} parent=11 // pred_check_branch
          %273 = sbr.rel (%p271) target = $region28
        $region27: #{tpu_custom_call.1} parent=11 // pred_region
          _
        $region28: #{tpu_custom_call.1} parent=11 // pred_fallthru
          _
        // Predicated region
        $region29: #{tpu_custom_call.1} parent=11 // pred_check
          %p274 = pneg %p153
        $region30: #{tpu_custom_call.1} parent=11 // pred_check_branch
          %276 = sbr.rel (%p274) target = $region32
        $region31: #{tpu_custom_call.1} parent=11 // pred_region
          _
        $region32: #{tpu_custom_call.1} parent=11 // pred_fallthru
          _
        // Predicated region
        $region33: #{tpu_custom_call.1} parent=11 // pred_check
          %p277 = pneg %p174
        $region34: #{tpu_custom_call.1} parent=11 // pred_check_branch
          %279 = sbr.rel (%p277) target = $region36
        $region35: #{tpu_custom_call.1} parent=11 // pred_region
          _
        $region36: #{tpu_custom_call.1} parent=11 // pred_fallthru
          _
        // Predicated region
        $region37: #{tpu_custom_call.1} parent=11 // pred_check
          %p280 = pneg %p195
        $region38: #{tpu_custom_call.1} parent=11 // pred_check_branch
          %282 = sbr.rel (%p280) target = $region40
        $region39: #{tpu_custom_call.1} parent=11 // pred_region
          _
        $region40: #{tpu_custom_call.1} parent=11 // pred_fallthru
          _
      $region12: #{tpu_custom_call.1} parent=5 // pred_fallthru
        _
      %p283 = scmp.lt.s32.totalorder %s22, 2
      // Predicated region
      $region41: #{tpu_custom_call.1} parent=5 // pred_check
        %p284 = pneg %p283
      $region42: #{tpu_custom_call.1} parent=5 // pred_check_branch
        %286 = sbr.rel (%p284) target = $region44
      $region43: #{tpu_custom_call.1} parent=5 // pred_region
        // Predicated region
        $region45: #{tpu_custom_call.1} parent=43 // pred_check
          %p287 = pneg %p42
        $region46: #{tpu_custom_call.1} parent=43 // pred_check_branch
          %289 = sbr.rel (%p287) target = $region48
        $region47: #{tpu_custom_call.1} parent=43 // pred_region
          %p290 = scmp.lt.s32.totalorder %s22, 1
          %s291 = scalar_select %p290, %s22, 1
          %s292 = smul.addr %s291, 8
          %s293 = scalar_lea.vmem %s0, %s292
        $region48: #{tpu_custom_call.1} parent=43 // pred_fallthru
          _
      $region44: #{tpu_custom_call.1} parent=5 // pred_fallthru
        _
      %p294 = scmp.le.s32.totalorder 1, %s22
      %p295 = scmp.lt.s32.totalorder %s22, 3
      %p296 = pnand %p294, %p295
      %p297 = pneg %p296
      // Predicated region
      $region49: #{tpu_custom_call.1} parent=5 // pred_check
        _
      $region50: #{tpu_custom_call.1} parent=5 // pred_check_branch
        %299 = sbr.rel (%p296) target = $region52
      $region51: #{tpu_custom_call.1} parent=5 // pred_region
        %s300 = ssub.s32 %s22, 1
        %p301 = scmp.lt.s32.totalorder %s27, 1
        %s302 = scalar_select %p301, %s27, 1
        %s303 = smul.addr %s302, 8
        %s304 = scalar_lea.vmem %s0, %s303
        %p305 = pneg %p48
        %p306 = pneg %p45
        %p307 = pneg %p69
        %p308 = pneg %p66
        %p309 = pneg %p90
        %p310 = pneg %p87
        %p311 = pneg %p111
        %p312 = pneg %p108
        %p313 = pneg %p132
        %p314 = pneg %p129
        %p315 = pneg %p153
        %p316 = pneg %p150
        %p317 = pneg %p174
        %p318 = pneg %p171
        %p319 = pneg %p195
        %p320 = pneg %p192
        %p321 = pneg %p221
        %p322 = pneg %p218
        %s323 = sand.u32 %s208, 1
        %s324 = scalar_lea.sflag [#allocation3], %s323
        %s325 = sand.u32 %s208, 1
        %s326 = smul.addr %s325, 8
        %s327 = scalar_lea.vmem [#allocation2], %s326
        %p328 = pneg %p247
        %p329 = pneg %p244
        %s330 = sand.u32 %s234, 1
        %s331 = scalar_lea.sflag [#allocation5], %s330
        %s332 = sand.u32 %s234, 1
        %s333 = scalar_lea.vmem [#allocation4], %s332
        %p334 = scmp.lt.s32.totalorder %s27, 1
        %s335 = scalar_select %p334, %s27, 1
        %s336 = smul.addr %s335, 8
        %s337 = scalar_lea.vmem %s0, %s336
        %v338 = vld [vmem:[%s337] sm:$0xff]
        %v339 = vld [vmem:[%s1] sm:$0xff]
        %341 = vset.pattern.permute.xlu0 0
        %342 = vperm.xlu0 %341, %v339
        %v343 = vpop.permute.xlu0 %342
        %v345 = vmul.f32 %v338, %v343
        %v346 = vld [vmem:[%s2] sm:$0xff]
        %v347 = vld [vmem:[%s2 + $0x8] sm:$0xff]
        %v348 = vld [vmem:[%s2 + $0x10] sm:$0xff]
        %v349 = vld [vmem:[%s2 + $0x18] sm:$0xff]
        %v350 = vld [vmem:[%s2 + $0x20] sm:$0xff]
        %v351 = vld [vmem:[%s2 + $0x28] sm:$0xff]
        %v352 = vld [vmem:[%s2 + $0x30] sm:$0xff]
        %v353 = vld [vmem:[%s2 + $0x38] sm:$0xff]
        %v354 = vld [vmem:[%s3] sm:$0xff]
        %v355 = vld [vmem:[%s3 + $0x8] sm:$0xff]
        %v356 = vld [vmem:[%s3 + $0x10] sm:$0xff]
        %v357 = vld [vmem:[%s3 + $0x18] sm:$0xff]
        %v358 = vld [vmem:[%s3 + $0x20] sm:$0xff]
        %v359 = vld [vmem:[%s3 + $0x28] sm:$0xff]
        %v360 = vld [vmem:[%s3 + $0x30] sm:$0xff]
        %v361 = vld [vmem:[%s3 + $0x38] sm:$0xff]
        %363 = vset.pattern.permute.xlu0 0
        %364 = vperm.xlu0 %363, %v354
        %v365 = vpop.permute.xlu0 %364
        %368 = vset.pattern.permute.xlu0 0
        %369 = vperm.xlu0 %368, %v355
        %v370 = vpop.permute.xlu0 %369
        %373 = vset.pattern.permute.xlu0 0
        %374 = vperm.xlu0 %373, %v356
        %v375 = vpop.permute.xlu0 %374
        %378 = vset.pattern.permute.xlu0 0
        %379 = vperm.xlu0 %378, %v357
        %v380 = vpop.permute.xlu0 %379
        %383 = vset.pattern.permute.xlu0 0
        %384 = vperm.xlu0 %383, %v358
        %v385 = vpop.permute.xlu0 %384
        %388 = vset.pattern.permute.xlu0 0
        %389 = vperm.xlu0 %388, %v359
        %v390 = vpop.permute.xlu0 %389
        %393 = vset.pattern.permute.xlu0 0
        %394 = vperm.xlu0 %393, %v360
        %v395 = vpop.permute.xlu0 %394
        %398 = vset.pattern.permute.xlu0 0
        %399 = vperm.xlu0 %398, %v361
        %v400 = vpop.permute.xlu0 %399
        %vm402 = vcmask 64512
        %v404 = vsel %vm402, %v346, 0
        %v407 = vsel %vm402, %v347, 0
        %v410 = vsel %vm402, %v348, 0
        %v413 = vsel %vm402, %v349, 0
        %v416 = vsel %vm402, %v350, 0
        %v419 = vsel %vm402, %v351, 0
        %v422 = vsel %vm402, %v352, 0
        %v425 = vsel %vm402, %v353, 0
        %427 = vmatprep.subr.mxu0 0.0
        %428 = vmatpush1.msra.mxu0 %v345
        %429 = vmatprep.subr.mxu0 0.0
        %430 = vmatpush1.msra.mxu0 0.0
        %431 = vmatprep.subr.mxu0 0.0
        %432 = vmatpush1.msra.mxu0 0.0
        %433 = vmatprep.subr.mxu0 0.0
        %434 = vmatpush1.msra.mxu0 0.0
        %435 = vmatprep.subr.mxu0 0.0
        %436 = vmatpush1.msra.mxu0 0.0
        %437 = vmatprep.subr.mxu0 0.0
        %438 = vmatpush1.msra.mxu0 0.0
        %439 = vmatprep.subr.mxu0 0.0
        %440 = vmatpush1.msra.mxu0 0.0
        %441 = vmatprep.subr.mxu0 0.0
        %442 = vmatpush1.msra.mxu0 0.0
        %443 = vmatprep.subr.mxu0 0.0
        %444 = vmatpush1.msra.mxu0 0.0
        %445 = vmatprep.subr.mxu0 0.0
        %446 = vmatpush1.msra.mxu0 0.0
        %447 = vmatprep.subr.mxu0 0.0
        %448 = vmatpush1.msra.mxu0 0.0
        %449 = vmatprep.subr.mxu0 0.0
        %450 = vmatpush1.msra.mxu0 0.0
        %451 = vmatprep.subr.mxu0 0.0
        %452 = vmatpush1.msra.mxu0 0.0
        %453 = vmatprep.subr.mxu0 0.0
        %454 = vmatpush1.msra.mxu0 0.0
        %455 = vmatprep.subr.mxu0 0.0
        %456 = vmatpush1.msra.mxu0 0.0
        %457 = vmatprep.subr.mxu0 0.0
        %458 = vmatpush1.msra.mxu0 0.0
        %459 = vmatprep.subr.mxu0 0.0
        %460 = vmatpush1.msra.mxu0 0.0
        %461 = vmatprep.subr.mxu0 0.0
        %462 = vmatpush1.msra.mxu0 0.0
        %463 = vmatprep.subr.mxu0 0.0
        %464 = vmatpush1.msra.mxu0 0.0
        %465 = vmatprep.subr.mxu0 0.0
        %466 = vmatpush1.msra.mxu0 0.0
        %467 = vmatprep.subr.mxu0 0.0
        %468 = vmatpush1.msra.mxu0 0.0
        %469 = vmatprep.subr.mxu0 0.0
        %470 = vmatpush1.msra.mxu0 0.0
        %471 = vmatprep.subr.mxu0 0.0
        %472 = vmatpush1.msra.mxu0 0.0
        %473 = vmatprep.subr.mxu0 0.0
        %474 = vmatpush1.msra.mxu0 0.0
        %475 = vmatprep.subr.mxu0 0.0
        %476 = vmatpush1.msra.mxu0 0.0
        %477 = vmatprep.subr.mxu0 0.0
        %478 = vmatpush1.msra.mxu0 0.0
        %479 = vmatprep.subr.mxu0 0.0
        %480 = vmatpush1.msra.mxu0 0.0
        %481 = vmatprep.subr.mxu0 0.0
        %482 = vmatpush1.msra.mxu0 0.0
        %483 = vmatprep.subr.mxu0 0.0
        %484 = vmatpush1.msra.mxu0 0.0
        %485 = vmatprep.subr.mxu0 0.0
        %486 = vmatpush1.msra.mxu0 0.0
        %487 = vmatprep.subr.mxu0 0.0
        %488 = vmatpush1.msra.mxu0 0.0
        %489 = vmatprep.subr.mxu0 0.0
        %490 = vmatpush1.msra.mxu0 0.0
        %491 = vmatprep.mubr.f32.mxu0 0.0
        %492 = vmatmul.mubr.f32.gmra.mrb[0].mxu0 %v404
        %v493 = vpop.f32.mrb[0].mxu0
        %v494 = vadd.f32 %v365, %v493
        %v495 = vpop.f32.mrb[0].mxu0
        %496 = vmatprep.mubr.f32.mxu0 0.0
        %497 = vmatmul.mubr.f32.gmra.mrb[0].mxu0 %v407
        %v498 = vpop.f32.mrb[0].mxu0
        %v499 = vadd.f32 %v370, %v498
        %v500 = vpop.f32.mrb[0].mxu0
        %501 = vmatprep.mubr.f32.mxu0 0.0
        %502 = vmatmul.mubr.f32.gmra.mrb[0].mxu0 %v410
        %v503 = vpop.f32.mrb[0].mxu0
        %v504 = vadd.f32 %v375, %v503
        %v505 = vpop.f32.mrb[0].mxu0
        %506 = vmatprep.mubr.f32.mxu0 0.0
        %507 = vmatmul.mubr.f32.gmra.mrb[0].mxu0 %v413
        %v508 = vpop.f32.mrb[0].mxu0
        %v509 = vadd.f32 %v380, %v508
        %v510 = vpop.f32.mrb[0].mxu0
        %511 = vmatprep.mubr.f32.mxu0 0.0
        %512 = vmatmul.mubr.f32.gmra.mrb[0].mxu0 %v416
        %v513 = vpop.f32.mrb[0].mxu0
        %v514 = vadd.f32 %v385, %v513
        %v515 = vpop.f32.mrb[0].mxu0
        %516 = vmatprep.mubr.f32.mxu0 0.0
        %517 = vmatmul.mubr.f32.gmra.mrb[0].mxu0 %v419
        %v518 = vpop.f32.mrb[0].mxu0
        %v519 = vadd.f32 %v390, %v518
        %v520 = vpop.f32.mrb[0].mxu0
        %521 = vmatprep.mubr.f32.mxu0 0.0
        %522 = vmatmul.mubr.f32.gmra.mrb[0].mxu0 %v422
        %v523 = vpop.f32.mrb[0].mxu0
        %v524 = vadd.f32 %v395, %v523
        %v525 = vpop.f32.mrb[0].mxu0
        %526 = vmatprep.mubr.f32.mxu0 0.0
        %527 = vmatmul.mubr.f32.gmra.mrb[0].mxu0 %v425
        %v528 = vpop.f32.mrb[0].mxu0
        %v529 = vadd.f32 %v400, %v528
        %v530 = vpop.f32.mrb[0].mxu0
        %531 = vdwg.mxu0
        %v532 = vmax.f32 %v494, 0.0
        %v533 = vmax.f32 %v499, 0.0
        %v534 = vmax.f32 %v504, 0.0
        %v535 = vmax.f32 %v509, 0.0
        %v536 = vmax.f32 %v514, 0.0
        %v537 = vmax.f32 %v519, 0.0
        %v538 = vmax.f32 %v524, 0.0
        %v539 = vmax.f32 %v529, 0.0
        %v540 = vld [vmem:[%s4] sm:$0xff]
        %v541 = vld [vmem:[%s5] sm:$0xff]
        %543 = vset.pattern.permute.xlu0 0
        %544 = vperm.xlu0 %543, %v541
        %v545 = vpop.permute.xlu0 %544
        %vm547 = vcmask 261120
        %v549 = vsel %vm547, %v540, 0
        %551 = vmatprep.subr.mxu0 0.0
        %552 = vmatpush1.msra.mxu0 %v532
        %553 = vmatprep.subr.mxu0 0.0
        %554 = vmatpush1.msra.mxu0 %v533
        %555 = vmatprep.subr.mxu0 0.0
        %556 = vmatpush1.msra.mxu0 %v534
        %557 = vmatprep.subr.mxu0 0.0
        %558 = vmatpush1.msra.mxu0 %v535
        %559 = vmatprep.subr.mxu0 0.0
        %560 = vmatpush1.msra.mxu0 0.0
        %561 = vmatprep.subr.mxu0 0.0
        %562 = vmatpush1.msra.mxu0 0.0
        %563 = vmatprep.subr.mxu0 0.0
        %564 = vmatpush1.msra.mxu0 0.0
        %565 = vmatprep.subr.mxu0 0.0
        %566 = vmatpush1.msra.mxu0 0.0
        %567 = vmatprep.subr.mxu0 0.0
        %568 = vmatpush1.msra.mxu0 0.0
        %569 = vmatprep.subr.mxu0 0.0
        %570 = vmatpush1.msra.mxu0 0.0
        %571 = vmatprep.subr.mxu0 0.0
        %572 = vmatpush1.msra.mxu0 0.0
        %573 = vmatprep.subr.mxu0 0.0
        %574 = vmatpush1.msra.mxu0 0.0
        %575 = vmatprep.subr.mxu0 0.0
        %576 = vmatpush1.msra.mxu0 0.0
        %577 = vmatprep.subr.mxu0 0.0
        %578 = vmatpush1.msra.mxu0 0.0
        %579 = vmatprep.subr.mxu0 0.0
        %580 = vmatpush1.msra.mxu0 0.0
        %581 = vmatprep.subr.mxu0 0.0
        %582 = vmatpush1.msra.mxu0 0.0
        %583 = vmatprep.subr.mxu0 0.0
        %584 = vmatpush1.msra.mxu0 0.0
        %585 = vmatprep.subr.mxu0 0.0
        %586 = vmatpush1.msra.mxu0 0.0
        %587 = vmatprep.subr.mxu0 0.0
        %588 = vmatpush1.msra.mxu0 0.0
        %589 = vmatprep.subr.mxu0 0.0
        %590 = vmatpush1.msra.mxu0 0.0
        %591 = vmatprep.subr.mxu0 0.0
        %592 = vmatpush1.msra.mxu0 0.0
        %593 = vmatprep.subr.mxu0 0.0
        %594 = vmatpush1.msra.mxu0 0.0
        %595 = vmatprep.subr.mxu0 0.0
        %596 = vmatpush1.msra.mxu0 0.0
        %597 = vmatprep.subr.mxu0 0.0
        %598 = vmatpush1.msra.mxu0 0.0
        %599 = vmatprep.subr.mxu0 0.0
        %600 = vmatpush1.msra.mxu0 0.0
        %601 = vmatprep.subr.mxu0 0.0
        %602 = vmatpush1.msra.mxu0 0.0
        %603 = vmatprep.subr.mxu0 0.0
        %604 = vmatpush1.msra.mxu0 0.0
        %605 = vmatprep.subr.mxu0 0.0
        %606 = vmatpush1.msra.mxu0 0.0
        %607 = vmatprep.subr.mxu0 0.0
        %608 = vmatpush1.msra.mxu0 0.0
        %609 = vmatprep.subr.mxu0 0.0
        %610 = vmatpush1.msra.mxu0 0.0
        %611 = vmatprep.subr.mxu0 0.0
        %612 = vmatpush1.msra.mxu0 0.0
        %613 = vmatprep.subr.mxu0 0.0
        %614 = vmatpush1.msra.mxu0 0.0
        %615 = vmatprep.mubr.f32.mxu0 0.0
        %616 = vmatmul.mubr.f32.gmra.mrb[0].mxu0 %v549
        %v617 = vpop.f32.mrb[0].mxu0
        %v618 = vadd.f32 %v545, %v617
        %v619 = vpop.f32.mrb[0].mxu0
        %620 = vdwg.mxu0
        %v621 = vtanh.pop %v618
        %v622 = vld [vmem:[%s6] sm:$0xff]
        %v623 = vld [vmem:[%s7] sm:$0xff]
        %625 = vset.pattern.permute.xlu0 0
        %626 = vperm.xlu0 %625, %v623
        %v627 = vpop.permute.xlu0 %626
        %v630 = vsel %vm547, %v622, 0
        %632 = vmatprep.subr.mxu0 0.0
        %633 = vmatpush1.msra.mxu0 %v536
        %634 = vmatprep.subr.mxu0 0.0
        %635 = vmatpush1.msra.mxu0 %v537
        %636 = vmatprep.subr.mxu0 0.0
        %637 = vmatpush1.msra.mxu0 %v538
        %638 = vmatprep.subr.mxu0 0.0
        %639 = vmatpush1.msra.mxu0 %v539
        %640 = vmatprep.subr.mxu0 0.0
        %641 = vmatpush1.msra.mxu0 0.0
        %642 = vmatprep.subr.mxu0 0.0
        %643 = vmatpush1.msra.mxu0 0.0
        %644 = vmatprep.subr.mxu0 0.0
        %645 = vmatpush1.msra.mxu0 0.0
        %646 = vmatprep.subr.mxu0 0.0
        %647 = vmatpush1.msra.mxu0 0.0
        %648 = vmatprep.subr.mxu0 0.0
        %649 = vmatpush1.msra.mxu0 0.0
        %650 = vmatprep.subr.mxu0 0.0
        %651 = vmatpush1.msra.mxu0 0.0
        %652 = vmatprep.subr.mxu0 0.0
        %653 = vmatpush1.msra.mxu0 0.0
        %654 = vmatprep.subr.mxu0 0.0
        %655 = vmatpush1.msra.mxu0 0.0
        %656 = vmatprep.subr.mxu0 0.0
        %657 = vmatpush1.msra.mxu0 0.0
        %658 = vmatprep.subr.mxu0 0.0
        %659 = vmatpush1.msra.mxu0 0.0
        %660 = vmatprep.subr.mxu0 0.0
        %661 = vmatpush1.msra.mxu0 0.0
        %662 = vmatprep.subr.mxu0 0.0
        %663 = vmatpush1.msra.mxu0 0.0
        %664 = vmatprep.subr.mxu0 0.0
        %665 = vmatpush1.msra.mxu0 0.0
        %666 = vmatprep.subr.mxu0 0.0
        %667 = vmatpush1.msra.mxu0 0.0
        %668 = vmatprep.subr.mxu0 0.0
        %669 = vmatpush1.msra.mxu0 0.0
        %670 = vmatprep.subr.mxu0 0.0
        %671 = vmatpush1.msra.mxu0 0.0
        %672 = vmatprep.subr.mxu0 0.0
        %673 = vmatpush1.msra.mxu0 0.0
        %674 = vmatprep.subr.mxu0 0.0
        %675 = vmatpush1.msra.mxu0 0.0
        %676 = vmatprep.subr.mxu0 0.0
        %677 = vmatpush1.msra.mxu0 0.0
        %678 = vmatprep.subr.mxu0 0.0
        %679 = vmatpush1.msra.mxu0 0.0
        %680 = vmatprep.subr.mxu0 0.0
        %681 = vmatpush1.msra.mxu0 0.0
        %682 = vmatprep.subr.mxu0 0.0
        %683 = vmatpush1.msra.mxu0 0.0
        %684 = vmatprep.subr.mxu0 0.0
        %685 = vmatpush1.msra.mxu0 0.0
        %686 = vmatprep.subr.mxu0 0.0
        %687 = vmatpush1.msra.mxu0 0.0
        %688 = vmatprep.subr.mxu0 0.0
        %689 = vmatpush1.msra.mxu0 0.0
        %690 = vmatprep.subr.mxu0 0.0
        %691 = vmatpush1.msra.mxu0 0.0
        %692 = vmatprep.subr.mxu0 0.0
        %693 = vmatpush1.msra.mxu0 0.0
        %694 = vmatprep.subr.mxu0 0.0
        %695 = vmatpush1.msra.mxu0 0.0
        %696 = vmatprep.mubr.f32.mxu0 0.0
        %697 = vmatmul.mubr.f32.gmra.mrb[0].mxu0 %v630
        %v698 = vpop.f32.mrb[0].mxu0
        %v699 = vadd.f32 %v627, %v698
        %v700 = vpop.f32.mrb[0].mxu0
        %701 = vdwg.mxu0
        %v702 = vmul.f32 %v621, 1.442695
        %v703 = vpow.pop %v702
        %v704 = vmul.f32 %v703, %v338
        %v705 = vadd.f32 %v345, %v704
        %v706 = vadd.f32 %v705, %v699
        %v707 = vrot.slane %v621, 4
        %v708 = vadd.f32 %v621, %v707
        %v709 = vrot.slane %v708, 2
        %v710 = vadd.f32 %v708, %v709
        %v711 = vrot.slane %v710, 1
        %v712 = vadd.f32 %v710, %v711
        %v713 = vadd.f32 %v712, 0.0
        %v714 = vmul.f32 %v706, %v343
        %s715 = scalar_lea.vmem %s2, 64
        %v716 = vld [vmem:[%s715] sm:$0xff]
        %v717 = vld [vmem:[%s715 + $0x8] sm:$0xff]
        %v718 = vld [vmem:[%s715 + $0x10] sm:$0xff]
        %v719 = vld [vmem:[%s715 + $0x18] sm:$0xff]
        %v720 = vld [vmem:[%s715 + $0x20] sm:$0xff]
        %v721 = vld [vmem:[%s715 + $0x28] sm:$0xff]
        %v722 = vld [vmem:[%s715 + $0x30] sm:$0xff]
        %v723 = vld [vmem:[%s715 + $0x38] sm:$0xff]
        %s724 = scalar_lea.vmem %s3, 64
        %v725 = vld [vmem:[%s724] sm:$0xff]
        %v726 = vld [vmem:[%s724 + $0x8] sm:$0xff]
        %v727 = vld [vmem:[%s724 + $0x10] sm:$0xff]
        %v728 = vld [vmem:[%s724 + $0x18] sm:$0xff]
        %v729 = vld [vmem:[%s724 + $0x20] sm:$0xff]
        %v730 = vld [vmem:[%s724 + $0x28] sm:$0xff]
        %v731 = vld [vmem:[%s724 + $0x30] sm:$0xff]
        %v732 = vld [vmem:[%s724 + $0x38] sm:$0xff]
        %734 = vset.pattern.permute.xlu0 0
        %735 = vperm.xlu0 %734, %v725
        %v736 = vpop.permute.xlu0 %735
        %739 = vset.pattern.permute.xlu0 0
        %740 = vperm.xlu0 %739, %v726
        %v741 = vpop.permute.xlu0 %740
        %744 = vset.pattern.permute.xlu0 0
        %745 = vperm.xlu0 %744, %v727
        %v746 = vpop.permute.xlu0 %745
        %749 = vset.pattern.permute.xlu0 0
        %750 = vperm.xlu0 %749, %v728
        %v751 = vpop.permute.xlu0 %750
        %754 = vset.pattern.permute.xlu0 0
        %755 = vperm.xlu0 %754, %v729
        %v756 = vpop.permute.xlu0 %755
        %759 = vset.pattern.permute.xlu0 0
        %760 = vperm.xlu0 %759, %v730
        %v761 = vpop.permute.xlu0 %760
        %764 = vset.pattern.permute.xlu0 0
        %765 = vperm.xlu0 %764, %v731
        %v766 = vpop.permute.xlu0 %765
        %769 = vset.pattern.permute.xlu0 0
        %770 = vperm.xlu0 %769, %v732
        %v771 = vpop.permute.xlu0 %770
        %v774 = vsel %vm402, %v716, 0
        %v777 = vsel %vm402, %v717, 0
        %v780 = vsel %vm402, %v718, 0
        %v783 = vsel %vm402, %v719, 0
        %v786 = vsel %vm402, %v720, 0
        %v789 = vsel %vm402, %v721, 0
        %v792 = vsel %vm402, %v722, 0
        %v795 = vsel %vm402, %v723, 0
        %797 = vmatprep.subr.mxu0 0.0
        %798 = vmatpush1.msra.mxu0 %v714
        %799 = vmatprep.subr.mxu0 0.0
        %800 = vmatpush1.msra.mxu0 0.0
        %801 = vmatprep.subr.mxu0 0.0
        %802 = vmatpush1.msra.mxu0 0.0
        %803 = vmatprep.subr.mxu0 0.0
        %804 = vmatpush1.msra.mxu0 0.0
        %805 = vmatprep.subr.mxu0 0.0
        %806 = vmatpush1.msra.mxu0 0.0
        %807 = vmatprep.subr.mxu0 0.0
        %808 = vmatpush1.msra.mxu0 0.0
        %809 = vmatprep.subr.mxu0 0.0
        %810 = vmatpush1.msra.mxu0 0.0
        %811 = vmatprep.subr.mxu0 0.0
        %812 = vmatpush1.msra.mxu0 0.0
        %813 = vmatprep.subr.mxu0 0.0
        %814 = vmatpush1.msra.mxu0 0.0
        %815 = vmatprep.subr.mxu0 0.0
        %816 = vmatpush1.msra.mxu0 0.0
        %817 = vmatprep.subr.mxu0 0.0
        %818 = vmatpush1.msra.mxu0 0.0
        %819 = vmatprep.subr.mxu0 0.0
        %820 = vmatpush1.msra.mxu0 0.0
        %821 = vmatprep.subr.mxu0 0.0
        %822 = vmatpush1.msra.mxu0 0.0
        %823 = vmatprep.subr.mxu0 0.0
        %824 = vmatpush1.msra.mxu0 0.0
        %825 = vmatprep.subr.mxu0 0.0
        %826 = vmatpush1.msra.mxu0 0.0
        %827 = vmatprep.subr.mxu0 0.0
        %828 = vmatpush1.msra.mxu0 0.0
        %829 = vmatprep.subr.mxu0 0.0
        %830 = vmatpush1.msra.mxu0 0.0
        %831 = vmatprep.subr.mxu0 0.0
        %832 = vmatpush1.msra.mxu0 0.0
        %833 = vmatprep.subr.mxu0 0.0
        %834 = vmatpush1.msra.mxu0 0.0
        %835 = vmatprep.subr.mxu0 0.0
        %836 = vmatpush1.msra.mxu0 0.0
        %837 = vmatprep.subr.mxu0 0.0
        %838 = vmatpush1.msra.mxu0 0.0
        %839 = vmatprep.subr.mxu0 0.0
        %840 = vmatpush1.msra.mxu0 0.0
        %841 = vmatprep.subr.mxu0 0.0
        %842 = vmatpush1.msra.mxu0 0.0
        %843 = vmatprep.subr.mxu0 0.0
        %844 = vmatpush1.msra.mxu0 0.0
        %845 = vmatprep.subr.mxu0 0.0
        %846 = vmatpush1.msra.mxu0 0.0
        %847 = vmatprep.subr.mxu0 0.0
        %848 = vmatpush1.msra.mxu0 0.0
        %849 = vmatprep.subr.mxu0 0.0
        %850 = vmatpush1.msra.mxu0 0.0
        %851 = vmatprep.subr.mxu0 0.0
        %852 = vmatpush1.msra.mxu0 0.0
        %853 = vmatprep.subr.mxu0 0.0
        %854 = vmatpush1.msra.mxu0 0.0
        %855 = vmatprep.subr.mxu0 0.0
        %856 = vmatpush1.msra.mxu0 0.0
        %857 = vmatprep.subr.mxu0 0.0
        %858 = vmatpush1.msra.mxu0 0.0
        %859 = vmatprep.subr.mxu0 0.0
        %860 = vmatpush1.msra.mxu0 0.0
        %861 = vmatprep.mubr.f32.mxu0 0.0
        %862 = vmatmul.mubr.f32.gmra.mrb[0].mxu0 %v774
        %v863 = vpop.f32.mrb[0].mxu0
        %v864 = vadd.f32 %v736, %v863
        %v865 = vpop.f32.mrb[0].mxu0
        %866 = vmatprep.mubr.f32.mxu0 0.0
        %867 = vmatmul.mubr.f32.gmra.mrb[0].mxu0 %v777
        %v868 = vpop.f32.mrb[0].mxu0
        %v869 = vadd.f32 %v741, %v868
        %v870 = vpop.f32.mrb[0].mxu0
        %871 = vmatprep.mubr.f32.mxu0 0.0
        %872 = vmatmul.mubr.f32.gmra.mrb[0].mxu0 %v780
        %v873 = vpop.f32.mrb[0].mxu0
        %v874 = vadd.f32 %v746, %v873
        %v875 = vpop.f32.mrb[0].mxu0
        %876 = vmatprep.mubr.f32.mxu0 0.0
        %877 = vmatmul.mubr.f32.gmra.mrb[0].mxu0 %v783
        %v878 = vpop.f32.mrb[0].mxu0
        %v879 = vadd.f32 %v751, %v878
        %v880 = vpop.f32.mrb[0].mxu0
        %881 = vmatprep.mubr.f32.mxu0 0.0
        %882 = vmatmul.mubr.f32.gmra.mrb[0].mxu0 %v786
        %v883 = vpop.f32.mrb[0].mxu0
        %v884 = vadd.f32 %v756, %v883
        %v885 = vpop.f32.mrb[0].mxu0
        %886 = vmatprep.mubr.f32.mxu0 0.0
        %887 = vmatmul.mubr.f32.gmra.mrb[0].mxu0 %v789
        %v888 = vpop.f32.mrb[0].mxu0
        %v889 = vadd.f32 %v761, %v888
        %v890 = vpop.f32.mrb[0].mxu0
        %891 = vmatprep.mubr.f32.mxu0 0.0
        %892 = vmatmul.mubr.f32.gmra.mrb[0].mxu0 %v792
        %v893 = vpop.f32.mrb[0].mxu0
        %v894 = vadd.f32 %v766, %v893
        %v895 = vpop.f32.mrb[0].mxu0
        %896 = vmatprep.mubr.f32.mxu0 0.0
        %897 = vmatmul.mubr.f32.gmra.mrb[0].mxu0 %v795
        %v898 = vpop.f32.mrb[0].mxu0
        %v899 = vadd.f32 %v771, %v898
        %v900 = vpop.f32.mrb[0].mxu0
        %901 = vdwg.mxu0
        %v902 = vmax.f32 %v864, 0.0
        %v903 = vmax.f32 %v869, 0.0
        %v904 = vmax.f32 %v874, 0.0
        %v905 = vmax.f32 %v879, 0.0
        %v906 = vmax.f32 %v884, 0.0
        %v907 = vmax.f32 %v889, 0.0
        %v908 = vmax.f32 %v894, 0.0
        %v909 = vmax.f32 %v899, 0.0
        %s910 = scalar_lea.vmem %s4, 8
        %v911 = vld [vmem:[%s910] sm:$0xff]
        %s912 = scalar_lea.vmem %s5, 8
        %v913 = vld [vmem:[%s912] sm:$0xff]
        %915 = vset.pattern.permute.xlu0 0
        %916 = vperm.xlu0 %915, %v913
        %v917 = vpop.permute.xlu0 %916
        %v920 = vsel %vm547, %v911, 0
        %922 = vmatprep.subr.mxu0 0.0
        %923 = vmatpush1.msra.mxu0 %v902
        %924 = vmatprep.subr.mxu0 0.0
        %925 = vmatpush1.msra.mxu0 %v903
        %926 = vmatprep.subr.mxu0 0.0
        %927 = vmatpush1.msra.mxu0 %v904
        %928 = vmatprep.subr.mxu0 0.0
        %929 = vmatpush1.msra.mxu0 %v905
        %930 = vmatprep.subr.mxu0 0.0
        %931 = vmatpush1.msra.mxu0 0.0
        %932 = vmatprep.subr.mxu0 0.0
        %933 = vmatpush1.msra.mxu0 0.0
        %934 = vmatprep.subr.mxu0 0.0
        %935 = vmatpush1.msra.mxu0 0.0
        %936 = vmatprep.subr.mxu0 0.0
        %937 = vmatpush1.msra.mxu0 0.0
        %938 = vmatprep.subr.mxu0 0.0
        %939 = vmatpush1.msra.mxu0 0.0
        %940 = vmatprep.subr.mxu0 0.0
        %941 = vmatpush1.msra.mxu0 0.0
        %942 = vmatprep.subr.mxu0 0.0
        %943 = vmatpush1.msra.mxu0 0.0
        %944 = vmatprep.subr.mxu0 0.0
        %945 = vmatpush1.msra.mxu0 0.0
        %946 = vmatprep.subr.mxu0 0.0
        %947 = vmatpush1.msra.mxu0 0.0
        %948 = vmatprep.subr.mxu0 0.0
        %949 = vmatpush1.msra.mxu0 0.0
        %950 = vmatprep.subr.mxu0 0.0
        %951 = vmatpush1.msra.mxu0 0.0
        %952 = vmatprep.subr.mxu0 0.0
        %953 = vmatpush1.msra.mxu0 0.0
        %954 = vmatprep.subr.mxu0 0.0
        %955 = vmatpush1.msra.mxu0 0.0
        %956 = vmatprep.subr.mxu0 0.0
        %957 = vmatpush1.msra.mxu0 0.0
        %958 = vmatprep.subr.mxu0 0.0
        %959 = vmatpush1.msra.mxu0 0.0
        %960 = vmatprep.subr.mxu0 0.0
        %961 = vmatpush1.msra.mxu0 0.0
        %962 = vmatprep.subr.mxu0 0.0
        %963 = vmatpush1.msra.mxu0 0.0
        %964 = vmatprep.subr.mxu0 0.0
        %965 = vmatpush1.msra.mxu0 0.0
        %966 = vmatprep.subr.mxu0 0.0
        %967 = vmatpush1.msra.mxu0 0.0
        %968 = vmatprep.subr.mxu0 0.0
        %969 = vmatpush1.msra.mxu0 0.0
        %970 = vmatprep.subr.mxu0 0.0
        %971 = vmatpush1.msra.mxu0 0.0
        %972 = vmatprep.subr.mxu0 0.0
        %973 = vmatpush1.msra.mxu0 0.0
        %974 = vmatprep.subr.mxu0 0.0
        %975 = vmatpush1.msra.mxu0 0.0
        %976 = vmatprep.subr.mxu0 0.0
        %977 = vmatpush1.msra.mxu0 0.0
        %978 = vmatprep.subr.mxu0 0.0
        %979 = vmatpush1.msra.mxu0 0.0
        %980 = vmatprep.subr.mxu0 0.0
        %981 = vmatpush1.msra.mxu0 0.0
        %982 = vmatprep.subr.mxu0 0.0
        %983 = vmatpush1.msra.mxu0 0.0
        %984 = vmatprep.subr.mxu0 0.0
        %985 = vmatpush1.msra.mxu0 0.0
        %986 = vmatprep.mubr.f32.mxu0 0.0
        %987 = vmatmul.mubr.f32.gmra.mrb[0].mxu0 %v920
        %v988 = vpop.f32.mrb[0].mxu0
        %v989 = vadd.f32 %v917, %v988
        %v990 = vpop.f32.mrb[0].mxu0
        %991 = vdwg.mxu0
        %v992 = vtanh.pop %v989
        %s993 = scalar_lea.vmem %s6, 8
        %v994 = vld [vmem:[%s993] sm:$0xff]
        %s995 = scalar_lea.vmem %s7, 8
        %v996 = vld [vmem:[%s995] sm:$0xff]
        %998 = vset.pattern.permute.xlu0 0
        %999 = vperm.xlu0 %998, %v996
        %v1000 = vpop.permute.xlu0 %999
        %v1003 = vsel %vm547, %v994, 0
        %1005 = vmatprep.subr.mxu0 0.0
        %1006 = vmatpush1.msra.mxu0 %v906
        %1007 = vmatprep.subr.mxu0 0.0
        %1008 = vmatpush1.msra.mxu0 %v907
        %1009 = vmatprep.subr.mxu0 0.0
        %1010 = vmatpush1.msra.mxu0 %v908
        %1011 = vmatprep.subr.mxu0 0.0
        %1012 = vmatpush1.msra.mxu0 %v909
        %1013 = vmatprep.subr.mxu0 0.0
        %1014 = vmatpush1.msra.mxu0 0.0
        %1015 = vmatprep.subr.mxu0 0.0
        %1016 = vmatpush1.msra.mxu0 0.0
        %1017 = vmatprep.subr.mxu0 0.0
        %1018 = vmatpush1.msra.mxu0 0.0
        %1019 = vmatprep.subr.mxu0 0.0
        %1020 = vmatpush1.msra.mxu0 0.0
        %1021 = vmatprep.subr.mxu0 0.0
        %1022 = vmatpush1.msra.mxu0 0.0
        %1023 = vmatprep.subr.mxu0 0.0
        %1024 = vmatpush1.msra.mxu0 0.0
        %1025 = vmatprep.subr.mxu0 0.0
        %1026 = vmatpush1.msra.mxu0 0.0
        %1027 = vmatprep.subr.mxu0 0.0
        %1028 = vmatpush1.msra.mxu0 0.0
        %1029 = vmatprep.subr.mxu0 0.0
        %1030 = vmatpush1.msra.mxu0 0.0
        %1031 = vmatprep.subr.mxu0 0.0
        %1032 = vmatpush1.msra.mxu0 0.0
        %1033 = vmatprep.subr.mxu0 0.0
        %1034 = vmatpush1.msra.mxu0 0.0
        %1035 = vmatprep.subr.mxu0 0.0
        %1036 = vmatpush1.msra.mxu0 0.0
        %1037 = vmatprep.subr.mxu0 0.0
        %1038 = vmatpush1.msra.mxu0 0.0
        %1039 = vmatprep.subr.mxu0 0.0
        %1040 = vmatpush1.msra.mxu0 0.0
        %1041 = vmatprep.subr.mxu0 0.0
        %1042 = vmatpush1.msra.mxu0 0.0
        %1043 = vmatprep.subr.mxu0 0.0
        %1044 = vmatpush1.msra.mxu0 0.0
        %1045 = vmatprep.subr.mxu0 0.0
        %1046 = vmatpush1.msra.mxu0 0.0
        %1047 = vmatprep.subr.mxu0 0.0
        %1048 = vmatpush1.msra.mxu0 0.0
        %1049 = vmatprep.subr.mxu0 0.0
        %1050 = vmatpush1.msra.mxu0 0.0
        %1051 = vmatprep.subr.mxu0 0.0
        %1052 = vmatpush1.msra.mxu0 0.0
        %1053 = vmatprep.subr.mxu0 0.0
        %1054 = vmatpush1.msra.mxu0 0.0
        %1055 = vmatprep.subr.mxu0 0.0
        %1056 = vmatpush1.msra.mxu0 0.0
        %1057 = vmatprep.subr.mxu0 0.0
        %1058 = vmatpush1.msra.mxu0 0.0
        %1059 = vmatprep.subr.mxu0 0.0
        %1060 = vmatpush1.msra.mxu0 0.0
        %1061 = vmatprep.subr.mxu0 0.0
        %1062 = vmatpush1.msra.mxu0 0.0
        %1063 = vmatprep.subr.mxu0 0.0
        %1064 = vmatpush1.msra.mxu0 0.0
        %1065 = vmatprep.subr.mxu0 0.0
        %1066 = vmatpush1.msra.mxu0 0.0
        %1067 = vmatprep.subr.mxu0 0.0
        %1068 = vmatpush1.msra.mxu0 0.0
        %1069 = vmatprep.mubr.f32.mxu0 0.0
        %1070 = vmatmul.mubr.f32.gmra.mrb[0].mxu0 %v1003
        %v1071 = vpop.f32.mrb[0].mxu0
        %v1072 = vadd.f32 %v1000, %v1071
        %v1073 = vpop.f32.mrb[0].mxu0
        %1074 = vdwg.mxu0
        %v1075 = vmul.f32 %v992, 1.442695
        %v1076 = vpow.pop %v1075
        %v1077 = vmul.f32 %v1076, %v706
        %v1078 = vadd.f32 %v714, %v1077
        %v1079 = vadd.f32 %v1078, %v1072
        %v1080 = vrot.slane %v992, 4
        %v1081 = vadd.f32 %v992, %v1080
        %v1082 = vrot.slane %v1081, 2
        %v1083 = vadd.f32 %v1081, %v1082
        %v1084 = vrot.slane %v1083, 1
        %v1085 = vadd.f32 %v1083, %v1084
        %v1086 = vadd.f32 %v713, %v1085
        %v1087 = vmul.f32 %v1079, %v343
        %s1088 = scalar_lea.vmem %s2, 128
        %v1089 = vld [vmem:[%s1088] sm:$0xff]
        %v1090 = vld [vmem:[%s1088 + $0x8] sm:$0xff]
        %v1091 = vld [vmem:[%s1088 + $0x10] sm:$0xff]
        %v1092 = vld [vmem:[%s1088 + $0x18] sm:$0xff]
        %v1093 = vld [vmem:[%s1088 + $0x20] sm:$0xff]
        %v1094 = vld [vmem:[%s1088 + $0x28] sm:$0xff]
        %v1095 = vld [vmem:[%s1088 + $0x30] sm:$0xff]
        %v1096 = vld [vmem:[%s1088 + $0x38] sm:$0xff]
        %s1097 = scalar_lea.vmem %s3, 128
        %v1098 = vld [vmem:[%s1097] sm:$0xff]
        %v1099 = vld [vmem:[%s1097 + $0x8] sm:$0xff]
        %v1100 = vld [vmem:[%s1097 + $0x10] sm:$0xff]
        %v1101 = vld [vmem:[%s1097 + $0x18] sm:$0xff]
        %v1102 = vld [vmem:[%s1097 + $0x20] sm:$0xff]
        %v1103 = vld [vmem:[%s1097 + $0x28] sm:$0xff]
        %v1104 = vld [vmem:[%s1097 + $0x30] sm:$0xff]
        %v1105 = vld [vmem:[%s1097 + $0x38] sm:$0xff]
        %1107 = vset.pattern.permute.xlu0 0
        %1108 = vperm.xlu0 %1107, %v1098
        %v1109 = vpop.permute.xlu0 %1108
        %1112 = vset.pattern.permute.xlu0 0
        %1113 = vperm.xlu0 %1112, %v1099
        %v1114 = vpop.permute.xlu0 %1113
        %1117 = vset.pattern.permute.xlu0 0
        %1118 = vperm.xlu0 %1117, %v1100
        %v1119 = vpop.permute.xlu0 %1118
        %1122 = vset.pattern.permute.xlu0 0
        %1123 = vperm.xlu0 %1122, %v1101
        %v1124 = vpop.permute.xlu0 %1123
        %1127 = vset.pattern.permute.xlu0 0
        %1128 = vperm.xlu0 %1127, %v1102
        %v1129 = vpop.permute.xlu0 %1128
        %1132 = vset.pattern.permute.xlu0 0
        %1133 = vperm.xlu0 %1132, %v1103
        %v1134 = vpop.permute.xlu0 %1133
        %1137 = vset.pattern.permute.xlu0 0
        %1138 = vperm.xlu0 %1137, %v1104
        %v1139 = vpop.permute.xlu0 %1138
        %1142 = vset.pattern.permute.xlu0 0
        %1143 = vperm.xlu0 %1142, %v1105
        %v1144 = vpop.permute.xlu0 %1143
        %v1147 = vsel %vm402, %v1089, 0
        %v1150 = vsel %vm402, %v1090, 0
        %v1153 = vsel %vm402, %v1091, 0
        %v1156 = vsel %vm402, %v1092, 0
        %v1159 = vsel %vm402, %v1093, 0
        %v1162 = vsel %vm402, %v1094, 0
        %v1165 = vsel %vm402, %v1095, 0
        %v1168 = vsel %vm402, %v1096, 0
        %1170 = vmatprep.subr.mxu0 0.0
        %1171 = vmatpush1.msra.mxu0 %v1087
        %1172 = vmatprep.subr.mxu0 0.0
        %1173 = vmatpush1.msra.mxu0 0.0
        %1174 = vmatprep.subr.mxu0 0.0
        %1175 = vmatpush1.msra.mxu0 0.0
        %1176 = vmatprep.subr.mxu0 0.0
        %1177 = vmatpush1.msra.mxu0 0.0
        %1178 = vmatprep.subr.mxu0 0.0
        %1179 = vmatpush1.msra.mxu0 0.0
        %1180 = vmatprep.subr.mxu0 0.0
        %1181 = vmatpush1.msra.mxu0 0.0
        %1182 = vmatprep.subr.mxu0 0.0
        %1183 = vmatpush1.msra.mxu0 0.0
        %1184 = vmatprep.subr.mxu0 0.0
        %1185 = vmatpush1.msra.mxu0 0.0
        %1186 = vmatprep.subr.mxu0 0.0
        %1187 = vmatpush1.msra.mxu0 0.0
        %1188 = vmatprep.subr.mxu0 0.0
        %1189 = vmatpush1.msra.mxu0 0.0
        %1190 = vmatprep.subr.mxu0 0.0
        %1191 = vmatpush1.msra.mxu0 0.0
        %1192 = vmatprep.subr.mxu0 0.0
        %1193 = vmatpush1.msra.mxu0 0.0
        %1194 = vmatprep.subr.mxu0 0.0
        %1195 = vmatpush1.msra.mxu0 0.0
        %1196 = vmatprep.subr.mxu0 0.0
        %1197 = vmatpush1.msra.mxu0 0.0
        %1198 = vmatprep.subr.mxu0 0.0
        %1199 = vmatpush1.msra.mxu0 0.0
        %1200 = vmatprep.subr.mxu0 0.0
        %1201 = vmatpush1.msra.mxu0 0.0
        %1202 = vmatprep.subr.mxu0 0.0
        %1203 = vmatpush1.msra.mxu0 0.0
        %1204 = vmatprep.subr.mxu0 0.0
        %1205 = vmatpush1.msra.mxu0 0.0
        %1206 = vmatprep.subr.mxu0 0.0
        %1207 = vmatpush1.msra.mxu0 0.0
        %1208 = vmatprep.subr.mxu0 0.0
        %1209 = vmatpush1.msra.mxu0 0.0
        %1210 = vmatprep.subr.mxu0 0.0
        %1211 = vmatpush1.msra.mxu0 0.0
        %1212 = vmatprep.subr.mxu0 0.0
        %1213 = vmatpush1.msra.mxu0 0.0
        %1214 = vmatprep.subr.mxu0 0.0
        %1215 = vmatpush1.msra.mxu0 0.0
        %1216 = vmatprep.subr.mxu0 0.0
        %1217 = vmatpush1.msra.mxu0 0.0
        %1218 = vmatprep.subr.mxu0 0.0
        %1219 = vmatpush1.msra.mxu0 0.0
        %1220 = vmatprep.subr.mxu0 0.0
        %1221 = vmatpush1.msra.mxu0 0.0
        %1222 = vmatprep.subr.mxu0 0.0
        %1223 = vmatpush1.msra.mxu0 0.0
        %1224 = vmatprep.subr.mxu0 0.0
        %1225 = vmatpush1.msra.mxu0 0.0
        %1226 = vmatprep.subr.mxu0 0.0
        %1227 = vmatpush1.msra.mxu0 0.0
        %1228 = vmatprep.subr.mxu0 0.0
        %1229 = vmatpush1.msra.mxu0 0.0
        %1230 = vmatprep.subr.mxu0 0.0
        %1231 = vmatpush1.msra.mxu0 0.0
        %1232 = vmatprep.subr.mxu0 0.0
        %1233 = vmatpush1.msra.mxu0 0.0
        %1234 = vmatprep.mubr.f32.mxu0 0.0
        %1235 = vmatmul.mubr.f32.gmra.mrb[0].mxu0 %v1147
        %v1236 = vpop.f32.mrb[0].mxu0
        %v1237 = vadd.f32 %v1109, %v1236
        %v1238 = vpop.f32.mrb[0].mxu0
        %1239 = vmatprep.mubr.f32.mxu0 0.0
        %1240 = vmatmul.mubr.f32.gmra.mrb[0].mxu0 %v1150
        %v1241 = vpop.f32.mrb[0].mxu0
        %v1242 = vadd.f32 %v1114, %v1241
        %v1243 = vpop.f32.mrb[0].mxu0
        %1244 = vmatprep.mubr.f32.mxu0 0.0
        %1245 = vmatmul.mubr.f32.gmra.mrb[0].mxu0 %v1153
        %v1246 = vpop.f32.mrb[0].mxu0
        %v1247 = vadd.f32 %v1119, %v1246
        %v1248 = vpop.f32.mrb[0].mxu0
        %1249 = vmatprep.mubr.f32.mxu0 0.0
        %1250 = vmatmul.mubr.f32.gmra.mrb[0].mxu0 %v1156
        %v1251 = vpop.f32.mrb[0].mxu0
        %v1252 = vadd.f32 %v1124, %v1251
        %v1253 = vpop.f32.mrb[0].mxu0
        %1254 = vmatprep.mubr.f32.mxu0 0.0
        %1255 = vmatmul.mubr.f32.gmra.mrb[0].mxu0 %v1159
        %v1256 = vpop.f32.mrb[0].mxu0
        %v1257 = vadd.f32 %v1129, %v1256
        %v1258 = vpop.f32.mrb[0].mxu0
        %1259 = vmatprep.mubr.f32.mxu0 0.0
        %1260 = vmatmul.mubr.f32.gmra.mrb[0].mxu0 %v1162
        %v1261 = vpop.f32.mrb[0].mxu0
        %v1262 = vadd.f32 %v1134, %v1261
        %v1263 = vpop.f32.mrb[0].mxu0
        %1264 = vmatprep.mubr.f32.mxu0 0.0
        %1265 = vmatmul.mubr.f32.gmra.mrb[0].mxu0 %v1165
        %v1266 = vpop.f32.mrb[0].mxu0
        %v1267 = vadd.f32 %v1139, %v1266
        %v1268 = vpop.f32.mrb[0].mxu0
        %1269 = vmatprep.mubr.f32.mxu0 0.0
        %1270 = vmatmul.mubr.f32.gmra.mrb[0].mxu0 %v1168
        %v1271 = vpop.f32.mrb[0].mxu0
        %v1272 = vadd.f32 %v1144, %v1271
        %v1273 = vpop.f32.mrb[0].mxu0
        %1274 = vdwg.mxu0
        %v1275 = vmax.f32 %v1237, 0.0
        %v1276 = vmax.f32 %v1242, 0.0
        %v1277 = vmax.f32 %v1247, 0.0
        %v1278 = vmax.f32 %v1252, 0.0
        %v1279 = vmax.f32 %v1257, 0.0
        %v1280 = vmax.f32 %v1262, 0.0
        %v1281 = vmax.f32 %v1267, 0.0
        %v1282 = vmax.f32 %v1272, 0.0
        %s1283 = scalar_lea.vmem %s4, 16
        %v1284 = vld [vmem:[%s1283] sm:$0xff]
        %s1285 = scalar_lea.vmem %s5, 16
        %v1286 = vld [vmem:[%s1285] sm:$0xff]
        %1288 = vset.pattern.permute.xlu0 0
        %1289 = vperm.xlu0 %1288, %v1286
        %v1290 = vpop.permute.xlu0 %1289
        %v1293 = vsel %vm547, %v1284, 0
        %1295 = vmatprep.subr.mxu0 0.0
        %1296 = vmatpush1.msra.mxu0 %v1275
        %1297 = vmatprep.subr.mxu0 0.0
        %1298 = vmatpush1.msra.mxu0 %v1276
        %1299 = vmatprep.subr.mxu0 0.0
        %1300 = vmatpush1.msra.mxu0 %v1277
        %1301 = vmatprep.subr.mxu0 0.0
        %1302 = vmatpush1.msra.mxu0 %v1278
        %1303 = vmatprep.subr.mxu0 0.0
        %1304 = vmatpush1.msra.mxu0 0.0
        %1305 = vmatprep.subr.mxu0 0.0
        %1306 = vmatpush1.msra.mxu0 0.0
        %1307 = vmatprep.subr.mxu0 0.0
        %1308 = vmatpush1.msra.mxu0 0.0
        %1309 = vmatprep.subr.mxu0 0.0
        %1310 = vmatpush1.msra.mxu0 0.0
        %1311 = vmatprep.subr.mxu0 0.0
        %1312 = vmatpush1.msra.mxu0 0.0
        %1313 = vmatprep.subr.mxu0 0.0
        %1314 = vmatpush1.msra.mxu0 0.0
        %1315 = vmatprep.subr.mxu0 0.0
        %1316 = vmatpush1.msra.mxu0 0.0
        %1317 = vmatprep.subr.mxu0 0.0
        %1318 = vmatpush1.msra.mxu0 0.0
        %1319 = vmatprep.subr.mxu0 0.0
        %1320 = vmatpush1.msra.mxu0 0.0
        %1321 = vmatprep.subr.mxu0 0.0
        %1322 = vmatpush1.msra.mxu0 0.0
        %1323 = vmatprep.subr.mxu0 0.0
        %1324 = vmatpush1.msra.mxu0 0.0
        %1325 = vmatprep.subr.mxu0 0.0
        %1326 = vmatpush1.msra.mxu0 0.0
        %1327 = vmatprep.subr.mxu0 0.0
        %1328 = vmatpush1.msra.mxu0 0.0
        %1329 = vmatprep.subr.mxu0 0.0
        %1330 = vmatpush1.msra.mxu0 0.0
        %1331 = vmatprep.subr.mxu0 0.0
        %1332 = vmatpush1.msra.mxu0 0.0
        %1333 = vmatprep.subr.mxu0 0.0
        %1334 = vmatpush1.msra.mxu0 0.0
        %1335 = vmatprep.subr.mxu0 0.0
        %1336 = vmatpush1.msra.mxu0 0.0
        %1337 = vmatprep.subr.mxu0 0.0
        %1338 = vmatpush1.msra.mxu0 0.0
        %1339 = vmatprep.subr.mxu0 0.0
        %1340 = vmatpush1.msra.mxu0 0.0
        %1341 = vmatprep.subr.mxu0 0.0
        %1342 = vmatpush1.msra.mxu0 0.0
        %1343 = vmatprep.subr.mxu0 0.0
        %1344 = vmatpush1.msra.mxu0 0.0
        %1345 = vmatprep.subr.mxu0 0.0
        %1346 = vmatpush1.msra.mxu0 0.0
        %1347 = vmatprep.subr.mxu0 0.0
        %1348 = vmatpush1.msra.mxu0 0.0
        %1349 = vmatprep.subr.mxu0 0.0
        %1350 = vmatpush1.msra.mxu0 0.0
        %1351 = vmatprep.subr.mxu0 0.0
        %1352 = vmatpush1.msra.mxu0 0.0
        %1353 = vmatprep.subr.mxu0 0.0
        %1354 = vmatpush1.msra.mxu0 0.0
        %1355 = vmatprep.subr.mxu0 0.0
        %1356 = vmatpush1.msra.mxu0 0.0
        %1357 = vmatprep.subr.mxu0 0.0
        %1358 = vmatpush1.msra.mxu0 0.0
        %1359 = vmatprep.mubr.f32.mxu0 0.0
        %1360 = vmatmul.mubr.f32.gmra.mrb[0].mxu0 %v1293
        %v1361 = vpop.f32.mrb[0].mxu0
        %v1362 = vadd.f32 %v1290, %v1361
        %v1363 = vpop.f32.mrb[0].mxu0
        %1364 = vdwg.mxu0
        %v1365 = vtanh.pop %v1362
        %s1366 = scalar_lea.vmem %s6, 16
        %v1367 = vld [vmem:[%s1366] sm:$0xff]
        %s1368 = scalar_lea.vmem %s7, 16
        %v1369 = vld [vmem:[%s1368] sm:$0xff]
        %1371 = vset.pattern.permute.xlu0 0
        %1372 = vperm.xlu0 %1371, %v1369
        %v1373 = vpop.permute.xlu0 %1372
        %v1376 = vsel %vm547, %v1367, 0
        %1378 = vmatprep.subr.mxu0 0.0
        %1379 = vmatpush1.msra.mxu0 %v1279
        %1380 = vmatprep.subr.mxu0 0.0
        %1381 = vmatpush1.msra.mxu0 %v1280
        %1382 = vmatprep.subr.mxu0 0.0
        %1383 = vmatpush1.msra.mxu0 %v1281
        %1384 = vmatprep.subr.mxu0 0.0
        %1385 = vmatpush1.msra.mxu0 %v1282
        %1386 = vmatprep.subr.mxu0 0.0
        %1387 = vmatpush1.msra.mxu0 0.0
        %1388 = vmatprep.subr.mxu0 0.0
        %1389 = vmatpush1.msra.mxu0 0.0
        %1390 = vmatprep.subr.mxu0 0.0
        %1391 = vmatpush1.msra.mxu0 0.0
        %1392 = vmatprep.subr.mxu0 0.0
        %1393 = vmatpush1.msra.mxu0 0.0
        %1394 = vmatprep.subr.mxu0 0.0
        %1395 = vmatpush1.msra.mxu0 0.0
        %1396 = vmatprep.subr.mxu0 0.0
        %1397 = vmatpush1.msra.mxu0 0.0
        %1398 = vmatprep.subr.mxu0 0.0
        %1399 = vmatpush1.msra.mxu0 0.0
        %1400 = vmatprep.subr.mxu0 0.0
        %1401 = vmatpush1.msra.mxu0 0.0
        %1402 = vmatprep.subr.mxu0 0.0
        %1403 = vmatpush1.msra.mxu0 0.0
        %1404 = vmatprep.subr.mxu0 0.0
        %1405 = vmatpush1.msra.mxu0 0.0
        %1406 = vmatprep.subr.mxu0 0.0
        %1407 = vmatpush1.msra.mxu0 0.0
        %1408 = vmatprep.subr.mxu0 0.0
        %1409 = vmatpush1.msra.mxu0 0.0
        %1410 = vmatprep.subr.mxu0 0.0
        %1411 = vmatpush1.msra.mxu0 0.0
        %1412 = vmatprep.subr.mxu0 0.0
        %1413 = vmatpush1.msra.mxu0 0.0
        %1414 = vmatprep.subr.mxu0 0.0
        %1415 = vmatpush1.msra.mxu0 0.0
        %1416 = vmatprep.subr.mxu0 0.0
        %1417 = vmatpush1.msra.mxu0 0.0
        %1418 = vmatprep.subr.mxu0 0.0
        %1419 = vmatpush1.msra.mxu0 0.0
        %1420 = vmatprep.subr.mxu0 0.0
        %1421 = vmatpush1.msra.mxu0 0.0
        %1422 = vmatprep.subr.mxu0 0.0
        %1423 = vmatpush1.msra.mxu0 0.0
        %1424 = vmatprep.subr.mxu0 0.0
        %1425 = vmatpush1.msra.mxu0 0.0
        %1426 = vmatprep.subr.mxu0 0.0
        %1427 = vmatpush1.msra.mxu0 0.0
        %1428 = vmatprep.subr.mxu0 0.0
        %1429 = vmatpush1.msra.mxu0 0.0
        %1430 = vmatprep.subr.mxu0 0.0
        %1431 = vmatpush1.msra.mxu0 0.0
        %1432 = vmatprep.subr.mxu0 0.0
        %1433 = vmatpush1.msra.mxu0 0.0
        %1434 = vmatprep.subr.mxu0 0.0
        %1435 = vmatpush1.msra.mxu0 0.0
        %1436 = vmatprep.subr.mxu0 0.0
        %1437 = vmatpush1.msra.mxu0 0.0
        %1438 = vmatprep.subr.mxu0 0.0
        %1439 = vmatpush1.msra.mxu0 0.0
        %1440 = vmatprep.subr.mxu0 0.0
        %1441 = vmatpush1.msra.mxu0 0.0
        %1442 = vmatprep.mubr.f32.mxu0 0.0
        %1443 = vmatmul.mubr.f32.gmra.mrb[0].mxu0 %v1376
        %v1444 = vpop.f32.mrb[0].mxu0
        %v1445 = vadd.f32 %v1373, %v1444
        %v1446 = vpop.f32.mrb[0].mxu0
        %1447 = vdwg.mxu0
        %v1448 = vmul.f32 %v1365, 1.442695
        %v1449 = vpow.pop %v1448
        %v1450 = vmul.f32 %v1449, %v1079
        %v1451 = vadd.f32 %v1087, %v1450
        %v1452 = vadd.f32 %v1451, %v1445
        %v1453 = vrot.slane %v1365, 4
        %v1454 = vadd.f32 %v1365, %v1453
        %v1455 = vrot.slane %v1454, 2
        %v1456 = vadd.f32 %v1454, %v1455
        %v1457 = vrot.slane %v1456, 1
        %v1458 = vadd.f32 %v1456, %v1457
        %v1459 = vadd.f32 %v1086, %v1458
        %v1460 = vmul.f32 %v1452, %v343
        %s1461 = scalar_lea.vmem %s2, 192
        %v1462 = vld [vmem:[%s1461] sm:$0xff]
        %v1463 = vld [vmem:[%s1461 + $0x8] sm:$0xff]
        %v1464 = vld [vmem:[%s1461 + $0x10] sm:$0xff]
        %v1465 = vld [vmem:[%s1461 + $0x18] sm:$0xff]
        %v1466 = vld [vmem:[%s1461 + $0x20] sm:$0xff]
        %v1467 = vld [vmem:[%s1461 + $0x28] sm:$0xff]
        %v1468 = vld [vmem:[%s1461 + $0x30] sm:$0xff]
        %v1469 = vld [vmem:[%s1461 + $0x38] sm:$0xff]
        %s1470 = scalar_lea.vmem %s3, 192
        %v1471 = vld [vmem:[%s1470] sm:$0xff]
        %v1472 = vld [vmem:[%s1470 + $0x8] sm:$0xff]
        %v1473 = vld [vmem:[%s1470 + $0x10] sm:$0xff]
        %v1474 = vld [vmem:[%s1470 + $0x18] sm:$0xff]
        %v1475 = vld [vmem:[%s1470 + $0x20] sm:$0xff]
        %v1476 = vld [vmem:[%s1470 + $0x28] sm:$0xff]
        %v1477 = vld [vmem:[%s1470 + $0x30] sm:$0xff]
        %v1478 = vld [vmem:[%s1470 + $0x38] sm:$0xff]
        %1480 = vset.pattern.permute.xlu0 0
        %1481 = vperm.xlu0 %1480, %v1471
        %v1482 = vpop.permute.xlu0 %1481
        %1485 = vset.pattern.permute.xlu0 0
        %1486 = vperm.xlu0 %1485, %v1472
        %v1487 = vpop.permute.xlu0 %1486
        %1490 = vset.pattern.permute.xlu0 0
        %1491 = vperm.xlu0 %1490, %v1473
        %v1492 = vpop.permute.xlu0 %1491
        %1495 = vset.pattern.permute.xlu0 0
        %1496 = vperm.xlu0 %1495, %v1474
        %v1497 = vpop.permute.xlu0 %1496
        %1500 = vset.pattern.permute.xlu0 0
        %1501 = vperm.xlu0 %1500, %v1475
        %v1502 = vpop.permute.xlu0 %1501
        %1505 = vset.pattern.permute.xlu0 0
        %1506 = vperm.xlu0 %1505, %v1476
        %v1507 = vpop.permute.xlu0 %1506
        %1510 = vset.pattern.permute.xlu0 0
        %1511 = vperm.xlu0 %1510, %v1477
        %v1512 = vpop.permute.xlu0 %1511
        %1515 = vset.pattern.permute.xlu0 0
        %1516 = vperm.xlu0 %1515, %v1478
        %v1517 = vpop.permute.xlu0 %1516
        %v1520 = vsel %vm402, %v1462, 0
        %v1523 = vsel %vm402, %v1463, 0
        %v1526 = vsel %vm402, %v1464, 0
        %v1529 = vsel %vm402, %v1465, 0
        %v1532 = vsel %vm402, %v1466, 0
        %v1535 = vsel %vm402, %v1467, 0
        %v1538 = vsel %vm402, %v1468, 0
        %v1541 = vsel %vm402, %v1469, 0
        %1543 = vmatprep.subr.mxu0 0.0
        %1544 = vmatpush1.msra.mxu0 %v1460
        %1545 = vmatprep.subr.mxu0 0.0
        %1546 = vmatpush1.msra.mxu0 0.0
        %1547 = vmatprep.subr.mxu0 0.0
        %1548 = vmatpush1.msra.mxu0 0.0
        %1549 = vmatprep.subr.mxu0 0.0
        %1550 = vmatpush1.msra.mxu0 0.0
        %1551 = vmatprep.subr.mxu0 0.0
        %1552 = vmatpush1.msra.mxu0 0.0
        %1553 = vmatprep.subr.mxu0 0.0
        %1554 = vmatpush1.msra.mxu0 0.0
        %1555 = vmatprep.subr.mxu0 0.0
        %1556 = vmatpush1.msra.mxu0 0.0
        %1557 = vmatprep.subr.mxu0 0.0
        %1558 = vmatpush1.msra.mxu0 0.0
        %1559 = vmatprep.subr.mxu0 0.0
        %1560 = vmatpush1.msra.mxu0 0.0
        %1561 = vmatprep.subr.mxu0 0.0
        %1562 = vmatpush1.msra.mxu0 0.0
        %1563 = vmatprep.subr.mxu0 0.0
        %1564 = vmatpush1.msra.mxu0 0.0
        %1565 = vmatprep.subr.mxu0 0.0
        %1566 = vmatpush1.msra.mxu0 0.0
        %1567 = vmatprep.subr.mxu0 0.0
        %1568 = vmatpush1.msra.mxu0 0.0
        %1569 = vmatprep.subr.mxu0 0.0
        %1570 = vmatpush1.msra.mxu0 0.0
        %1571 = vmatprep.subr.mxu0 0.0
        %1572 = vmatpush1.msra.mxu0 0.0
        %1573 = vmatprep.subr.mxu0 0.0
        %1574 = vmatpush1.msra.mxu0 0.0
        %1575 = vmatprep.subr.mxu0 0.0
        %1576 = vmatpush1.msra.mxu0 0.0
        %1577 = vmatprep.subr.mxu0 0.0
        %1578 = vmatpush1.msra.mxu0 0.0
        %1579 = vmatprep.subr.mxu0 0.0
        %1580 = vmatpush1.msra.mxu0 0.0
        %1581 = vmatprep.subr.mxu0 0.0
        %1582 = vmatpush1.msra.mxu0 0.0
        %1583 = vmatprep.subr.mxu0 0.0
        %1584 = vmatpush1.msra.mxu0 0.0
        %1585 = vmatprep.subr.mxu0 0.0
        %1586 = vmatpush1.msra.mxu0 0.0
        %1587 = vmatprep.subr.mxu0 0.0
        %1588 = vmatpush1.msra.mxu0 0.0
        %1589 = vmatprep.subr.mxu0 0.0
        %1590 = vmatpush1.msra.mxu0 0.0
        %1591 = vmatprep.subr.mxu0 0.0
        %1592 = vmatpush1.msra.mxu0 0.0
        %1593 = vmatprep.subr.mxu0 0.0
        %1594 = vmatpush1.msra.mxu0 0.0
        %1595 = vmatprep.subr.mxu0 0.0
        %1596 = vmatpush1.msra.mxu0 0.0
        %1597 = vmatprep.subr.mxu0 0.0
        %1598 = vmatpush1.msra.mxu0 0.0
        %1599 = vmatprep.subr.mxu0 0.0
        %1600 = vmatpush1.msra.mxu0 0.0
        %1601 = vmatprep.subr.mxu0 0.0
        %1602 = vmatpush1.msra.mxu0 0.0
        %1603 = vmatprep.subr.mxu0 0.0
        %1604 = vmatpush1.msra.mxu0 0.0
        %1605 = vmatprep.subr.mxu0 0.0
        %1606 = vmatpush1.msra.mxu0 0.0
        %1607 = vmatprep.mubr.f32.mxu0 0.0
        %1608 = vmatmul.mubr.f32.gmra.mrb[0].mxu0 %v1520
        %v1609 = vpop.f32.mrb[0].mxu0
        %v1610 = vadd.f32 %v1482, %v1609
        %v1611 = vpop.f32.mrb[0].mxu0
        %1612 = vmatprep.mubr.f32.mxu0 0.0
        %1613 = vmatmul.mubr.f32.gmra.mrb[0].mxu0 %v1523
        %v1614 = vpop.f32.mrb[0].mxu0
        %v1615 = vadd.f32 %v1487, %v1614
        %v1616 = vpop.f32.mrb[0].mxu0
        %1617 = vmatprep.mubr.f32.mxu0 0.0
        %1618 = vmatmul.mubr.f32.gmra.mrb[0].mxu0 %v1526
        %v1619 = vpop.f32.mrb[0].mxu0
        %v1620 = vadd.f32 %v1492, %v1619
        %v1621 = vpop.f32.mrb[0].mxu0
        %1622 = vmatprep.mubr.f32.mxu0 0.0
        %1623 = vmatmul.mubr.f32.gmra.mrb[0].mxu0 %v1529
        %v1624 = vpop.f32.mrb[0].mxu0
        %v1625 = vadd.f32 %v1497, %v1624
        %v1626 = vpop.f32.mrb[0].mxu0
        %1627 = vmatprep.mubr.f32.mxu0 0.0
        %1628 = vmatmul.mubr.f32.gmra.mrb[0].mxu0 %v1532
        %v1629 = vpop.f32.mrb[0].mxu0
        %v1630 = vadd.f32 %v1502, %v1629
        %v1631 = vpop.f32.mrb[0].mxu0
        %1632 = vmatprep.mubr.f32.mxu0 0.0
        %1633 = vmatmul.mubr.f32.gmra.mrb[0].mxu0 %v1535
        %v1634 = vpop.f32.mrb[0].mxu0
        %v1635 = vadd.f32 %v1507, %v1634
        %v1636 = vpop.f32.mrb[0].mxu0
        %1637 = vmatprep.mubr.f32.mxu0 0.0
        %1638 = vmatmul.mubr.f32.gmra.mrb[0].mxu0 %v1538
        %v1639 = vpop.f32.mrb[0].mxu0
        %v1640 = vadd.f32 %v1512, %v1639
        %v1641 = vpop.f32.mrb[0].mxu0
        %1642 = vmatprep.mubr.f32.mxu0 0.0
        %1643 = vmatmul.mubr.f32.gmra.mrb[0].mxu0 %v1541
        %v1644 = vpop.f32.mrb[0].mxu0
        %v1645 = vadd.f32 %v1517, %v1644
        %v1646 = vpop.f32.mrb[0].mxu0
        %1647 = vdwg.mxu0
        %v1648 = vmax.f32 %v1610, 0.0
        %v1649 = vmax.f32 %v1615, 0.0
        %v1650 = vmax.f32 %v1620, 0.0
        %v1651 = vmax.f32 %v1625, 0.0
        %v1652 = vmax.f32 %v1630, 0.0
        %v1653 = vmax.f32 %v1635, 0.0
        %v1654 = vmax.f32 %v1640, 0.0
        %v1655 = vmax.f32 %v1645, 0.0
        %s1656 = scalar_lea.vmem %s4, 24
        %v1657 = vld [vmem:[%s1656] sm:$0xff]
        %s1658 = scalar_lea.vmem %s5, 24
        %v1659 = vld [vmem:[%s1658] sm:$0xff]
        %1661 = vset.pattern.permute.xlu0 0
        %1662 = vperm.xlu0 %1661, %v1659
        %v1663 = vpop.permute.xlu0 %1662
        %v1666 = vsel %vm547, %v1657, 0
        %1668 = vmatprep.subr.mxu0 0.0
        %1669 = vmatpush1.msra.mxu0 %v1648
        %1670 = vmatprep.subr.mxu0 0.0
        %1671 = vmatpush1.msra.mxu0 %v1649
        %1672 = vmatprep.subr.mxu0 0.0
        %1673 = vmatpush1.msra.mxu0 %v1650
        %1674 = vmatprep.subr.mxu0 0.0
        %1675 = vmatpush1.msra.mxu0 %v1651
        %1676 = vmatprep.subr.mxu0 0.0
        %1677 = vmatpush1.msra.mxu0 0.0
        %1678 = vmatprep.subr.mxu0 0.0
        %1679 = vmatpush1.msra.mxu0 0.0
        %1680 = vmatprep.subr.mxu0 0.0
        %1681 = vmatpush1.msra.mxu0 0.0
        %1682 = vmatprep.subr.mxu0 0.0
        %1683 = vmatpush1.msra.mxu0 0.0
        %1684 = vmatprep.subr.mxu0 0.0
        %1685 = vmatpush1.msra.mxu0 0.0
        %1686 = vmatprep.subr.mxu0 0.0
        %1687 = vmatpush1.msra.mxu0 0.0
        %1688 = vmatprep.subr.mxu0 0.0
        %1689 = vmatpush1.msra.mxu0 0.0
        %1690 = vmatprep.subr.mxu0 0.0
        %1691 = vmatpush1.msra.mxu0 0.0
        %1692 = vmatprep.subr.mxu0 0.0
        %1693 = vmatpush1.msra.mxu0 0.0
        %1694 = vmatprep.subr.mxu0 0.0
        %1695 = vmatpush1.msra.mxu0 0.0
        %1696 = vmatprep.subr.mxu0 0.0
        %1697 = vmatpush1.msra.mxu0 0.0
        %1698 = vmatprep.subr.mxu0 0.0
        %1699 = vmatpush1.msra.mxu0 0.0
        %1700 = vmatprep.subr.mxu0 0.0
        %1701 = vmatpush1.msra.mxu0 0.0
        %1702 = vmatprep.subr.mxu0 0.0
        %1703 = vmatpush1.msra.mxu0 0.0
        %1704 = vmatprep.subr.mxu0 0.0
        %1705 = vmatpush1.msra.mxu0 0.0
        %1706 = vmatprep.subr.mxu0 0.0
        %1707 = vmatpush1.msra.mxu0 0.0
        %1708 = vmatprep.subr.mxu0 0.0
        %1709 = vmatpush1.msra.mxu0 0.0
        %1710 = vmatprep.subr.mxu0 0.0
        %1711 = vmatpush1.msra.mxu0 0.0
        %1712 = vmatprep.subr.mxu0 0.0
        %1713 = vmatpush1.msra.mxu0 0.0
        %1714 = vmatprep.subr.mxu0 0.0
        %1715 = vmatpush1.msra.mxu0 0.0
        %1716 = vmatprep.subr.mxu0 0.0
        %1717 = vmatpush1.msra.mxu0 0.0
        %1718 = vmatprep.subr.mxu0 0.0
        %1719 = vmatpush1.msra.mxu0 0.0
        %1720 = vmatprep.subr.mxu0 0.0
        %1721 = vmatpush1.msra.mxu0 0.0
        %1722 = vmatprep.subr.mxu0 0.0
        %1723 = vmatpush1.msra.mxu0 0.0
        %1724 = vmatprep.subr.mxu0 0.0
        %1725 = vmatpush1.msra.mxu0 0.0
        %1726 = vmatprep.subr.mxu0 0.0
        %1727 = vmatpush1.msra.mxu0 0.0
        %1728 = vmatprep.subr.mxu0 0.0
        %1729 = vmatpush1.msra.mxu0 0.0
        %1730 = vmatprep.subr.mxu0 0.0
        %1731 = vmatpush1.msra.mxu0 0.0
        %1732 = vmatprep.mubr.f32.mxu0 0.0
        %1733 = vmatmul.mubr.f32.gmra.mrb[0].mxu0 %v1666
        %v1734 = vpop.f32.mrb[0].mxu0
        %v1735 = vadd.f32 %v1663, %v1734
        %v1736 = vpop.f32.mrb[0].mxu0
        %1737 = vdwg.mxu0
        %v1738 = vtanh.pop %v1735
        %s1739 = scalar_lea.vmem %s6, 24
        %v1740 = vld [vmem:[%s1739] sm:$0xff]
        %s1741 = scalar_lea.vmem %s7, 24
        %v1742 = vld [vmem:[%s1741] sm:$0xff]
        %1744 = vset.pattern.permute.xlu0 0
        %1745 = vperm.xlu0 %1744, %v1742
        %v1746 = vpop.permute.xlu0 %1745
        %v1749 = vsel %vm547, %v1740, 0
        %1751 = vmatprep.subr.mxu0 0.0
        %1752 = vmatpush1.msra.mxu0 %v1652
        %1753 = vmatprep.subr.mxu0 0.0
        %1754 = vmatpush1.msra.mxu0 %v1653
        %1755 = vmatprep.subr.mxu0 0.0
        %1756 = vmatpush1.msra.mxu0 %v1654
        %1757 = vmatprep.subr.mxu0 0.0
        %1758 = vmatpush1.msra.mxu0 %v1655
        %1759 = vmatprep.subr.mxu0 0.0
        %1760 = vmatpush1.msra.mxu0 0.0
        %1761 = vmatprep.subr.mxu0 0.0
        %1762 = vmatpush1.msra.mxu0 0.0
        %1763 = vmatprep.subr.mxu0 0.0
        %1764 = vmatpush1.msra.mxu0 0.0
        %1765 = vmatprep.subr.mxu0 0.0
        %1766 = vmatpush1.msra.mxu0 0.0
        %1767 = vmatprep.subr.mxu0 0.0
        %1768 = vmatpush1.msra.mxu0 0.0
        %1769 = vmatprep.subr.mxu0 0.0
        %1770 = vmatpush1.msra.mxu0 0.0
        %1771 = vmatprep.subr.mxu0 0.0
        %1772 = vmatpush1.msra.mxu0 0.0
        %1773 = vmatprep.subr.mxu0 0.0
        %1774 = vmatpush1.msra.mxu0 0.0
        %1775 = vmatprep.subr.mxu0 0.0
        %1776 = vmatpush1.msra.mxu0 0.0
        %1777 = vmatprep.subr.mxu0 0.0
        %1778 = vmatpush1.msra.mxu0 0.0
        %1779 = vmatprep.subr.mxu0 0.0
        %1780 = vmatpush1.msra.mxu0 0.0
        %1781 = vmatprep.subr.mxu0 0.0
        %1782 = vmatpush1.msra.mxu0 0.0
        %1783 = vmatprep.subr.mxu0 0.0
        %1784 = vmatpush1.msra.mxu0 0.0
        %1785 = vmatprep.subr.mxu0 0.0
        %1786 = vmatpush1.msra.mxu0 0.0
        %1787 = vmatprep.subr.mxu0 0.0
        %1788 = vmatpush1.msra.mxu0 0.0
        %1789 = vmatprep.subr.mxu0 0.0
        %1790 = vmatpush1.msra.mxu0 0.0
        %1791 = vmatprep.subr.mxu0 0.0
        %1792 = vmatpush1.msra.mxu0 0.0
        %1793 = vmatprep.subr.mxu0 0.0
        %1794 = vmatpush1.msra.mxu0 0.0
        %1795 = vmatprep.subr.mxu0 0.0
        %1796 = vmatpush1.msra.mxu0 0.0
        %1797 = vmatprep.subr.mxu0 0.0
        %1798 = vmatpush1.msra.mxu0 0.0
        %1799 = vmatprep.subr.mxu0 0.0
        %1800 = vmatpush1.msra.mxu0 0.0
        %1801 = vmatprep.subr.mxu0 0.0
        %1802 = vmatpush1.msra.mxu0 0.0
        %1803 = vmatprep.subr.mxu0 0.0
        %1804 = vmatpush1.msra.mxu0 0.0
        %1805 = vmatprep.subr.mxu0 0.0
        %1806 = vmatpush1.msra.mxu0 0.0
        %1807 = vmatprep.subr.mxu0 0.0
        %1808 = vmatpush1.msra.mxu0 0.0
        %1809 = vmatprep.subr.mxu0 0.0
        %1810 = vmatpush1.msra.mxu0 0.0
        %1811 = vmatprep.subr.mxu0 0.0
        %1812 = vmatpush1.msra.mxu0 0.0
        %1813 = vmatprep.subr.mxu0 0.0
        %1814 = vmatpush1.msra.mxu0 0.0
        %1815 = vmatprep.mubr.f32.mxu0 0.0
        %1816 = vmatmul.mubr.f32.gmra.mrb[0].mxu0 %v1749
        %v1817 = vpop.f32.mrb[0].mxu0
        %v1818 = vadd.f32 %v1746, %v1817
        %v1819 = vpop.f32.mrb[0].mxu0
        %1820 = vdwg.mxu0
        %v1821 = vmul.f32 %v1738, 1.442695
        %v1822 = vpow.pop %v1821
        %v1823 = vmul.f32 %v1822, %v1452
        %v1824 = vadd.f32 %v1460, %v1823
        %v1825 = vadd.f32 %v1824, %v1818
        %v1826 = vrot.slane %v1738, 4
        %v1827 = vadd.f32 %v1738, %v1826
        %v1828 = vrot.slane %v1827, 2
        %v1829 = vadd.f32 %v1827, %v1828
        %v1830 = vrot.slane %v1829, 1
        %v1831 = vadd.f32 %v1829, %v1830
        %v1832 = vadd.f32 %v1459, %v1831
        %1833 = vst [vmem:[%s327] sm:$0xff] %v1825
        %1834 = vst [vmem:[%s333] sm:$0x1] %v1832
        %s1835 = sand.u32 %s208, 1
        %s1836 = scalar_lea.sflag [#allocation3], %s1835
        %s1837 = sand.u32 %s208, 1
        %s1838 = smul.addr %s1837, 8
        %s1839 = scalar_lea.vmem [#allocation2], %s1838
        %s1840 = sand.u32 %s234, 1
        %s1841 = scalar_lea.sflag [#allocation5], %s1840
        %s1842 = sand.u32 %s234, 1
        %s1843 = scalar_lea.vmem [#allocation4], %s1842
        // Predicated region
        $region53: #{tpu_custom_call.1} parent=51 // pred_check
          %p1844 = pneg %p218
        $region54: #{tpu_custom_call.1} parent=51 // pred_check_branch
          %1846 = sbr.rel (%p1844) target = $region56
        $region55: #{tpu_custom_call.1} parent=51 // pred_region
          %s1848 = ssub.s32 128, 128
          %1849 = vsyncadd %s1836, %s1848
          %s1850 = smul.addr %s27, 128
          %s1851 = scalar_lea.hbm %s8, %s1850
          %s1853 = sshll.u32 %s1839, 4
          %s1854 = int_to_ptr.vmem [resolvable:$true] %s1853
          %1856 = dma.vmem_to_hbm [thread:$0]  %s1854, 128, %s1851, %s1836
        $region56: #{tpu_custom_call.1} parent=51 // pred_fallthru
          _
        // Predicated region
        $region57: #{tpu_custom_call.1} parent=51 // pred_check
          %p1857 = pneg %p244
        $region58: #{tpu_custom_call.1} parent=51 // pred_check_branch
          %1859 = sbr.rel (%p1857) target = $region60
        $region59: #{tpu_custom_call.1} parent=51 // pred_region
          %s1861 = ssub.s32 16, 16
          %1862 = vsyncadd %s1841, %s1861
          %s1863 = smul.addr %s27, 16
          %s1864 = scalar_lea.hbm %s9, %s1863
          %s1866 = sshll.u32 %s1843, 4
          %s1867 = int_to_ptr.vmem [resolvable:$true] %s1866
          %1869 = dma.vmem_to_hbm [thread:$0]  %s1867, 16, %s1864, %s1841
        $region60: #{tpu_custom_call.1} parent=51 // pred_fallthru
          _
      $region52: #{tpu_custom_call.1} parent=5 // pred_fallthru
        _
      %p1870 = scmp.le.s32.totalorder 2, %s22
      // Predicated region
      $region61: #{tpu_custom_call.1} parent=5 // pred_check
        %p1871 = pneg %p1870
      $region62: #{tpu_custom_call.1} parent=5 // pred_check_branch
        %1873 = sbr.rel (%p1871) target = $region64
      $region63: #{tpu_custom_call.1} parent=5 // pred_region
        %s1874 = ssub.s32 %s22, 2
        // Predicated region
        $region65: #{tpu_custom_call.1} parent=63 // pred_check
          %p1875 = pneg %p224
        $region66: #{tpu_custom_call.1} parent=63 // pred_check_branch
          %1877 = sbr.rel (%p1875) target = $region68
        $region67: #{tpu_custom_call.1} parent=63 // pred_region
          %s1878 = sand.u32 %s209, 1
          %s1879 = scalar_lea.sflag [#allocation3], %s1878
          %s1880 = sand.u32 %s209, 1
          %s1881 = smul.addr %s1880, 8
          %s1882 = scalar_lea.vmem [#allocation2], %s1881
          %1883 = dma.done %s1879, 128
        $region68: #{tpu_custom_call.1} parent=63 // pred_fallthru
          _
        // Predicated region
        $region69: #{tpu_custom_call.1} parent=63 // pred_check
          %p1884 = pneg %p250
        $region70: #{tpu_custom_call.1} parent=63 // pred_check_branch
          %1886 = sbr.rel (%p1884) target = $region72
        $region71: #{tpu_custom_call.1} parent=63 // pred_region
          %s1887 = sand.u32 %s235, 1
          %s1888 = scalar_lea.sflag [#allocation5], %s1887
          %s1889 = sand.u32 %s235, 1
          %s1890 = scalar_lea.vmem [#allocation4], %s1889
          %1891 = dma.done %s1888, 16
        $region72: #{tpu_custom_call.1} parent=63 // pred_fallthru
          _
      $region64: #{tpu_custom_call.1} parent=5 // pred_fallthru
        _
    $region6: #{tpu_custom_call.1} parent=1 // loop_footer
      %s26 = sadd.s32 1, %s22
    $region7: #{tpu_custom_call.1} parent=1 // loop_footer_branch
      %21 = sbr.rel target = $region3
    $region8: #{tpu_custom_call.1} parent=1 // loop_exit
      _
    %1892 = vsyncpa [#allocation3], 1
    %s1893 = scalar_lea.sflag [#allocation3], 1
    %1894 = vsyncpa %s1893, 1
    %1895 = vsyncpa [#allocation5], 1
    %s1896 = scalar_lea.sflag [#allocation5], 1
    %1897 = vsyncpa %s1896, 1

</llo_original>
